<compile_context>
chip_gen: v6e
topology: v6e:2x2x1
jax: 0.10.0
libtpu: 0.0.40
codegen_flags: <defaults>
</compile_context>

<pallas_src>
import functools

import jax
import jax.numpy as jnp
from jax import lax
from jax.experimental import pallas as pl
from jax.experimental.pallas import tpu as pltpu


# ---------------------------------------------------------------------------
# Pallas kernel: fused (concat + 3x3 conv + bias + sigmoid) on one row strip
# ---------------------------------------------------------------------------
def _fused_conv3x3_kernel(maskl_ref, maskr_ref, wu_ref, wr_ref, b_ref,
                          um_ref, ut_ref, ub_ref,      # `up` main / top / bottom halo
                          rm_ref, rt_ref, rb_ref,      # `res` main / top / bottom halo
                          out_ref,
                          xu_ref, xr_ref):             # VMEM scratch (flat strip + halo)
    # um_ref: (1, C1, TH*W)        flattened main rows of the strip
    # ut_ref/ub_ref: (1, 1, C1, W) halo row above / below the strip (zeros at image edge)
    # wu_ref: (9, Cout, C1)        conv taps for the `up` channels (tap = kh*3 + kw)
    # b_ref : (Cout, 1)
    # out_ref: (1, Cout, TH*W)     flattened NC(HW) output strip  (lane-dense)
    # xu_ref: (C1, (TH+2)*W + 2)   scratch: [0 | top | main | bottom | 0]
    thw = um_ref.shape[2]
    wcols = ut_ref.shape[3]
    lp = xu_ref.shape[1]                       # (TH+2)*W + 2
    cout = out_ref.shape[1]

    def fill(xs_ref, top_ref, main_ref, bot_ref):
        c = xs_ref.shape[0]
        # 1-element margins so every tap slice stays in-bounds (corner taps).
        xs_ref[:, 0:1] = jnp.zeros((c, 1), jnp.float32)
        xs_ref[:, lp - 1:lp] = jnp.zeros((c, 1), jnp.float32)
        xs_ref[:, 1:1 + wcols] = top_ref[0, 0]
        xs_ref[:, 1 + wcols:1 + wcols + thw] = main_ref[0]
        xs_ref[:, 1 + wcols + thw:1 + wcols + thw + wcols] = bot_ref[0, 0]

    fill(xu_ref, ut_ref, um_ref, ub_ref)
    fill(xr_ref, rt_ref, rm_ref, rb_ref)

    maskl = maskl_ref[...]                     # (1, TH*W): 1.0 where col > 0
    maskr = maskr_ref[...]                     # (1, TH*W): 1.0 where col < W-1

    acc = jnp.zeros((cout, thw), jnp.float32)
    for kh in range(3):
        for kw in range(3):
            k = kh * 3 + kw
            s0 = kh * wcols + kw               # contiguous lane-range slice per tap
            contrib = jnp.dot(wu_ref[k], xu_ref[:, s0:s0 + thw],
                              preferred_element_type=jnp.float32)
            contrib = contrib + jnp.dot(wr_ref[k], xr_ref[:, s0:s0 + thw],
                                        preferred_element_type=jnp.float32)
            if kw == 0:
                contrib = contrib * maskl      # zero-pad on the left column
            elif kw == 2:
                contrib = contrib * maskr      # zero-pad on the right column
            acc = acc + contrib

    out_ref[0] = jax.nn.sigmoid(acc + b_ref[...]).astype(out_ref.dtype)


# ---------------------------------------------------------------------------
# Wrapper helpers
# ---------------------------------------------------------------------------
def _interp_matrix(n_out, n_in, dtype=jnp.float32):
    """Bilinear (align_corners=True) interpolation matrix for one axis."""
    if n_in == 1:
        return jnp.ones((n_out, 1), dtype)
    src = jnp.arange(n_out, dtype=dtype) * (n_in - 1) / (n_out - 1)
    lo = jnp.clip(jnp.floor(src).astype(jnp.int32), 0, n_in - 2)
    frac = src - lo.astype(dtype)
    a = jnp.zeros((n_out, n_in), dtype)
    a = a.at[jnp.arange(n_out), lo].add(1.0 - frac)
    a = a.at[jnp.arange(n_out), lo + 1].add(frac)
    return a


def _upsample_2x(down):
    """scale_factor=2 bilinear upsample, align_corners=True (as in the module)."""
    n, c, h, w = down.shape
    ah = _interp_matrix(2 * h, h)
    aw = _interp_matrix(2 * w, w)
    up = jnp.einsum('oh,nchw->ncow', ah, down.astype(jnp.float32),
                    precision=lax.Precision.HIGHEST)
    return jnp.einsum('pw,ncow->ncop', aw, up, precision=lax.Precision.HIGHEST)


def _halo_rows(x4, th):
    """x4: (N, C, H, W).  Returns (top, bot): (N, T, C, W) with the row just
    above / below each TH-row strip (zeros at the image border)."""
    n, c, h, w = x4.shape
    t = h // th
    zrow = jnp.zeros((n, c, 1, w), x4.dtype)
    if t > 1:
        tops = x4[:, :, th - 1::th, :][:, :, :t - 1, :]   # rows TH-1, ..., (T-1)*TH-1
        bots = x4[:, :, th::th, :]                        # rows TH,   ..., (T-1)*TH
        top = jnp.concatenate([zrow, tops], axis=2)
        bot = jnp.concatenate([bots, zrow], axis=2)
    else:
        top = zrow
        bot = zrow
    return jnp.transpose(top, (0, 2, 1, 3)), jnp.transpose(bot, (0, 2, 1, 3))


def _pick_tile_rows(h, w, target_lanes=2048):
    """Largest divisor TH of H with TH*W a multiple of 128 and <= target_lanes;
    falls back to TH = H (single strip, full-dim block is always legal)."""
    cands = [th for th in range(1, h + 1)
             if h % th == 0 and th * w <= target_lanes
             and ((th * w) % 128 == 0 or th == h)]
    return max(cands) if cands else h


# ---------------------------------------------------------------------------
# Public forward (NCHW, matches the PyTorch module)
# ---------------------------------------------------------------------------
def unet_out_up_pallas(down, res, weight, bias, *, tile_rows=None):
    """UnetOutUp forward.  down: (N,C1,H,W), res: (N,C2,Hr,Wr),
    weight: (Cout, C1+C2, 3, 3), bias: (Cout,).  Returns (N, Cout, Hr, Wr)."""
    n, c1, _, _ = down.shape
    _, c2, hr, wr = res.shape
    cout, cin, kh, kw = weight.shape
    assert cin == c1 + c2 and kh == 3 and kw == 3

    # Bilinear 2x upsample (align_corners=True), then place into the res extent.
    up = _upsample_2x(down)                               # (N, C1, 2H, 2W) f32
    dy = hr - up.shape[2]
    dx = wr - up.shape[3]
    if dy or dx:
        up = jnp.pad(up, ((0, 0), (0, 0),
                          (dy // 2, dy - dy // 2), (dx // 2, dx - dx // 2)))
    res_f = res.astype(jnp.float32)

    th = tile_rows if tile_rows is not None else _pick_tile_rows(hr, wr)
    if hr % th:
        raise ValueError(f"tile_rows={th} must divide image height {hr}")
    t = hr // th
    thw = th * wr
    lp = (th + 2) * wr + 2

    # Flattened-spatial views (free reshapes) + tiny halo-row arrays.
    up_flat = up.reshape(n, c1, hr * wr)
    rs_flat = res_f.reshape(n, c2, hr * wr)
    up_top, up_bot = _halo_rows(up, th)                   # (N, T, C1, W)
    rs_top, rs_bot = _halo_rows(res_f, th)                # (N, T, C2, W)

    # Split the conv weight into per-branch tap stacks: tap k = kh*3 + kw.
    w_up = jnp.transpose(weight[:, :c1].astype(jnp.float32),
                         (2, 3, 0, 1)).reshape(9, cout, c1)
    w_rs = jnp.transpose(weight[:, c1:].astype(jnp.float32),
                         (2, 3, 0, 1)).reshape(9, cout, c2)
    b2 = bias.astype(jnp.float32).reshape(cout, 1)

    # Column-wrap masks for the left/right conv taps (grid-invariant, tiny).
    col = jnp.arange(thw, dtype=jnp.int32) % wr
    maskl = (col > 0).astype(jnp.float32).reshape(1, thw)
    maskr = (col < wr - 1).astype(jnp.float32).reshape(1, thw)

    out_flat = pl.pallas_call(
        _fused_conv3x3_kernel,
        out_shape=jax.ShapeDtypeStruct((n, cout, hr * wr), jnp.float32),
        grid=(n, t),
        in_specs=[
            pl.BlockSpec((1, thw), lambda b, s: (0, 0)),             # maskl
            pl.BlockSpec((1, thw), lambda b, s: (0, 0)),             # maskr
            pl.BlockSpec((9, cout, c1), lambda b, s: (0, 0, 0)),     # w_up taps
            pl.BlockSpec((9, cout, c2), lambda b, s: (0, 0, 0)),     # w_res taps
            pl.BlockSpec((cout, 1), lambda b, s: (0, 0)),            # bias
            pl.BlockSpec((1, c1, thw), lambda b, s: (b, 0, s)),      # up main strip
            pl.BlockSpec((1, 1, c1, wr), lambda b, s: (b, s, 0, 0)),  # up halo above
            pl.BlockSpec((1, 1, c1, wr), lambda b, s: (b, s, 0, 0)),  # up halo below
            pl.BlockSpec((1, c2, thw), lambda b, s: (b, 0, s)),      # res main strip
            pl.BlockSpec((1, 1, c2, wr), lambda b, s: (b, s, 0, 0)),  # res halo above
            pl.BlockSpec((1, 1, c2, wr), lambda b, s: (b, s, 0, 0)),  # res halo below
        ],
        out_specs=pl.BlockSpec((1, cout, thw), lambda b, s: (b, 0, s)),
        scratch_shapes=[
            pltpu.VMEM((c1, lp), jnp.float32),
            pltpu.VMEM((c2, lp), jnp.float32),
        ],
        compiler_params=pltpu.CompilerParams(
            dimension_semantics=("parallel", "parallel")),
    )(maskl, maskr, w_up, w_rs, b2,
      up_flat, up_top, up_bot, rs_flat, rs_top, rs_bot)

    return out_flat.reshape(n, cout, hr, wr)


# ---------------------------------------------------------------------------
# Independent pure-JAX reference (gather-based upsample + XLA conv)
# ---------------------------------------------------------------------------
def _ref_upsample_2x_align_corners(x):
    n, c, h, w = x.shape
    ho, wo = 2 * h, 2 * w

    def lerp_idx(n_out, n_in):
        if n_in == 1:
            z = jnp.zeros((n_out,), jnp.int32)
            return z, z, jnp.zeros((n_out,), jnp.float32)
        src = jnp.arange(n_out, dtype=jnp.float32) * (n_in - 1) / (n_out - 1)
        lo = jnp.clip(jnp.floor(src), 0, n_in - 2).astype(jnp.int32)
        return lo, lo + 1, src - lo.astype(jnp.float32)

    y0, y1, fy = lerp_idx(ho, h)
    x0, x1, fx = lerp_idx(wo, w)
    fy = fy[None, None, :, None]
    fx = fx[None, None, None, :]
    rows = x[:, :, y0, :] * (1.0 - fy) + x[:, :, y1, :] * fy          # (N,C,Ho,W)
    return rows[:, :, :, x0] * (1.0 - fx) + rows[:, :, :, x1] * fx    # (N,C,Ho,Wo)


def unet_out_up_reference(down, res, weight, bias):
    up = _ref_upsample_2x_align_corners(down.astype(jnp.float32))
    dy = res.shape[2] - up.shape[2]
    dx = res.shape[3] - up.shape[3]
    up = jnp.pad(up, ((0, 0), (0, 0),
                      (dy // 2, dy - dy // 2), (dx // 2, dx - dx // 2)))
    x = jnp.concatenate([up, res.astype(jnp.float32)], axis=1)
    y = lax.conv_general_dilated(
        x, weight.astype(jnp.float32),
        window_strides=(1, 1), padding=((1, 1), (1, 1)),
        dimension_numbers=('NCHW', 'OIHW', 'NCHW'),
        precision=lax.Precision.HIGHEST)
    return jax.nn.sigmoid(y + bias.astype(jnp.float32)[None, :, None, None])


# ---------------------------------------------------------------------------
if __name__ == "__main__":
    key = jax.random.PRNGKey(0)
    k_down, k_res, k_w, k_b = jax.random.split(key, 4)

    # down (2,6,16,16) upsampled to 32x32, res (2,4,32,32)
    # => concat channels in_ch = 10, out_ch = 4.  tile_rows=8 -> 4 row strips,
    # each strip block is (C, 8*32=256) lanes (multiple of 128 -> lane-dense).
    N, C_down, Hd, Wd = 2, 6, 16, 16
    C_res, out_ch = 4, 4
    in_ch = C_down + C_res

    down = jax.random.normal(k_down, (N, C_down, Hd, Wd), jnp.float32)
    res = jax.random.normal(k_res, (N, C_res, 2 * Hd, 2 * Wd), jnp.float32)
    weight = 0.1 * jax.random.normal(k_w, (out_ch, in_ch, 3, 3), jnp.float32)
    bias = 0.1 * jax.random.normal(k_b, (out_ch,), jnp.float32)

    fwd = jax.jit(functools.partial(unet_out_up_pallas, tile_rows=8))
    out = jax.block_until_ready(fwd(down, res, weight, bias))

    ref = unet_out_up_reference(down, res, weight, bias)
    assert out.shape == (N, out_ch, 2 * Hd, 2 * Wd), out.shape
    max_err = float(jnp.max(jnp.abs(out - ref)))
    assert max_err < 1e-4, max_err

    print("KERNEL_OK")
</pallas_src>

<mosaic_0001>
module attributes {stable_mosaic.version = 11 : i64} {
  func.func private @main(%arg0: i32) attributes {dimension_semantics = [#tpu.dimension_semantics<core_parallel>], iteration_bounds = array<i64: 2>, tpu.core_type = #tpu.core_type<sc_scalar_subcore>, window_params = []} {
    return
  }
}

module attributes {stable_mosaic.version = 11 : i64} {
  func.func private @main(%arg0: i32) attributes {dimension_semantics = [#tpu.dimension_semantics<core_parallel>], iteration_bounds = array<i64: 2>, tpu.core_type = #tpu.core_type<sc_scalar_subcore>, window_params = []} {
    return
  }
}

module attributes {stable_mosaic.version = 11 : i64} {
  func.func @_fused_conv3x3_kernel(%arg0: i32, %arg1: i32, %arg2: memref<1x256xf32, #tpu.memory_space<vmem>>, %arg3: memref<1x256xf32, #tpu.memory_space<vmem>>, %arg4: memref<9x4x6xf32, #tpu.memory_space<vmem>>, %arg5: memref<9x4x4xf32, #tpu.memory_space<vmem>>, %arg6: memref<4x1xf32, #tpu.memory_space<vmem>>, %arg7: memref<1x6x256xf32, #tpu.memory_space<vmem>>, %arg8: memref<1x1x6x32xf32, #tpu.memory_space<vmem>>, %arg9: memref<1x1x6x32xf32, #tpu.memory_space<vmem>>, %arg10: memref<1x4x256xf32, #tpu.memory_space<vmem>>, %arg11: memref<1x1x4x32xf32, #tpu.memory_space<vmem>>, %arg12: memref<1x1x4x32xf32, #tpu.memory_space<vmem>>, %arg13: memref<1x4x256xf32, #tpu.memory_space<vmem>>, %arg14: memref<6x322xf32, #tpu.memory_space<vmem>>, %arg15: memref<4x322xf32, #tpu.memory_space<vmem>>) attributes {dimension_semantics = [#tpu.dimension_semantics<parallel>, #tpu.dimension_semantics<parallel>], iteration_bounds = array<i64: 2, 4>, scalar_prefetch = 0 : i64, scratch_operands = 2 : i64, tpu.core_type = #tpu.core_type<tc>, window_params = [{pipeline_mode = #tpu.pipeline_mode<synchronous>, transform_indices = @transform_0, window_bounds = array<i64: 1, 256>}, {pipeline_mode = #tpu.pipeline_mode<synchronous>, transform_indices = @transform_1, window_bounds = array<i64: 1, 256>}, {pipeline_mode = #tpu.pipeline_mode<synchronous>, transform_indices = @transform_2, window_bounds = array<i64: 9, 4, 6>}, {pipeline_mode = #tpu.pipeline_mode<synchronous>, transform_indices = @transform_3, window_bounds = array<i64: 9, 4, 4>}, {pipeline_mode = #tpu.pipeline_mode<synchronous>, transform_indices = @transform_4, window_bounds = array<i64: 4, 1>}, {transform_indices = @transform_5, window_bounds = array<i64: 1, 6, 256>}, {transform_indices = @transform_6, window_bounds = array<i64: 1, 1, 6, 32>}, {transform_indices = @transform_7, window_bounds = array<i64: 1, 1, 6, 32>}, {transform_indices = @transform_8, window_bounds = array<i64: 1, 4, 256>}, {transform_indices = @transform_9, window_bounds = array<i64: 1, 1, 4, 32>}, {transform_indices = @transform_10, window_bounds = array<i64: 1, 1, 4, 32>}, {transform_indices = @transform_11, window_bounds = array<i64: 1, 4, 256>}]} {
    %cst = arith.constant 0.000000e+00 : f32
    %0 = vector.broadcast %cst : f32 to vector<6x1xf32>
    %c0 = arith.constant 0 : index
    %c0_0 = arith.constant 0 : index
    %1 = vector.load %arg14[%c0, %c0_0] : memref<6x322xf32, #tpu.memory_space<vmem>>, vector<6x1xf32>
    tpu.vector_store %arg14[%c0, %c0_0], %0 {strides = array<i32>} : memref<6x322xf32, #tpu.memory_space<vmem>>, vector<6x1xf32>,
    %cst_1 = arith.constant 0.000000e+00 : f32
    %2 = vector.broadcast %cst_1 : f32 to vector<6x1xf32>
    %c0_2 = arith.constant 0 : index
    %c321 = arith.constant 321 : index
    %3 = vector.load %arg14[%c0_2, %c321] : memref<6x322xf32, #tpu.memory_space<vmem>>, vector<6x1xf32>
    tpu.vector_store %arg14[%c0_2, %c321], %2 {strides = array<i32>} : memref<6x322xf32, #tpu.memory_space<vmem>>, vector<6x1xf32>,
    %c0_3 = arith.constant 0 : index
    %c0_4 = arith.constant 0 : index
    %c0_5 = arith.constant 0 : index
    %c0_6 = arith.constant 0 : index
    %4 = vector.load %arg8[%c0_3, %c0_4, %c0_5, %c0_6] : memref<1x1x6x32xf32, #tpu.memory_space<vmem>>, vector<1x1x6x32xf32>
    %5 = vector.shape_cast %4 : vector<1x1x6x32xf32> to vector<6x32xf32>
    %c0_7 = arith.constant 0 : index
    %c1 = arith.constant 1 : index
    %6 = vector.load %arg14[%c0_7, %c1] : memref<6x322xf32, #tpu.memory_space<vmem>>, vector<6x32xf32>
    tpu.vector_store %arg14[%c0_7, %c1], %5 {strides = array<i32>} : memref<6x322xf32, #tpu.memory_space<vmem>>, vector<6x32xf32>,
    %c0_8 = arith.constant 0 : index
    %c0_9 = arith.constant 0 : index
    %c0_10 = arith.constant 0 : index
    %7 = vector.load %arg7[%c0_8, %c0_9, %c0_10] : memref<1x6x256xf32, #tpu.memory_space<vmem>>, vector<1x6x256xf32>
    %8 = vector.shape_cast %7 : vector<1x6x256xf32> to vector<6x256xf32>
    %c0_11 = arith.constant 0 : index
    %c33 = arith.constant 33 : index
    %9 = vector.load %arg14[%c0_11, %c33] : memref<6x322xf32, #tpu.memory_space<vmem>>, vector<6x256xf32>
    tpu.vector_store %arg14[%c0_11, %c33], %8 {strides = array<i32>} : memref<6x322xf32, #tpu.memory_space<vmem>>, vector<6x256xf32>,
    %c0_12 = arith.constant 0 : index
    %c0_13 = arith.constant 0 : index
    %c0_14 = arith.constant 0 : index
    %c0_15 = arith.constant 0 : index
    %10 = vector.load %arg9[%c0_12, %c0_13, %c0_14, %c0_15] : memref<1x1x6x32xf32, #tpu.memory_space<vmem>>, vector<1x1x6x32xf32>
    %11 = vector.shape_cast %10 : vector<1x1x6x32xf32> to vector<6x32xf32>
    %c0_16 = arith.constant 0 : index
    %c289 = arith.constant 289 : index
    %12 = vector.load %arg14[%c0_16, %c289] : memref<6x322xf32, #tpu.memory_space<vmem>>, vector<6x32xf32>
    tpu.vector_store %arg14[%c0_16, %c289], %11 {strides = array<i32>} : memref<6x322xf32, #tpu.memory_space<vmem>>, vector<6x32xf32>,
    %cst_17 = arith.constant 0.000000e+00 : f32
    %13 = vector.broadcast %cst_17 : f32 to vector<4x1xf32>
    %c0_18 = arith.constant 0 : index
    %c0_19 = arith.constant 0 : index
    %14 = vector.load %arg15[%c0_18, %c0_19] : memref<4x322xf32, #tpu.memory_space<vmem>>, vector<4x1xf32>
    tpu.vector_store %arg15[%c0_18, %c0_19], %13 {strides = array<i32>} : memref<4x322xf32, #tpu.memory_space<vmem>>, vector<4x1xf32>,
    %cst_20 = arith.constant 0.000000e+00 : f32
    %15 = vector.broadcast %cst_20 : f32 to vector<4x1xf32>
    %c0_21 = arith.constant 0 : index
    %c321_22 = arith.constant 321 : index
    %16 = vector.load %arg15[%c0_21, %c321_22] : memref<4x322xf32, #tpu.memory_space<vmem>>, vector<4x1xf32>
    tpu.vector_store %arg15[%c0_21, %c321_22], %15 {strides = array<i32>} : memref<4x322xf32, #tpu.memory_space<vmem>>, vector<4x1xf32>,
    %c0_23 = arith.constant 0 : index
    %c0_24 = arith.constant 0 : index
    %c0_25 = arith.constant 0 : index
    %c0_26 = arith.constant 0 : index
    %17 = vector.load %arg11[%c0_23, %c0_24, %c0_25, %c0_26] : memref<1x1x4x32xf32, #tpu.memory_space<vmem>>, vector<1x1x4x32xf32>
    %18 = vector.shape_cast %17 : vector<1x1x4x32xf32> to vector<4x32xf32>
    %c0_27 = arith.constant 0 : index
    %c1_28 = arith.constant 1 : index
    %19 = vector.load %arg15[%c0_27, %c1_28] : memref<4x322xf32, #tpu.memory_space<vmem>>, vector<4x32xf32>
    tpu.vector_store %arg15[%c0_27, %c1_28], %18 {strides = array<i32>} : memref<4x322xf32, #tpu.memory_space<vmem>>, vector<4x32xf32>,
    %c0_29 = arith.constant 0 : index
    %c0_30 = arith.constant 0 : index
    %c0_31 = arith.constant 0 : index
    %20 = vector.load %arg10[%c0_29, %c0_30, %c0_31] : memref<1x4x256xf32, #tpu.memory_space<vmem>>, vector<1x4x256xf32>
    %21 = vector.shape_cast %20 : vector<1x4x256xf32> to vector<4x256xf32>
    %c0_32 = arith.constant 0 : index
    %c33_33 = arith.constant 33 : index
    %22 = vector.load %arg15[%c0_32, %c33_33] : memref<4x322xf32, #tpu.memory_space<vmem>>, vector<4x256xf32>
    tpu.vector_store %arg15[%c0_32, %c33_33], %21 {strides = array<i32>} : memref<4x322xf32, #tpu.memory_space<vmem>>, vector<4x256xf32>,
    %c0_34 = arith.constant 0 : index
    %c0_35 = arith.constant 0 : index
    %c0_36 = arith.constant 0 : index
    %c0_37 = arith.constant 0 : index
    %23 = vector.load %arg12[%c0_34, %c0_35, %c0_36, %c0_37] : memref<1x1x4x32xf32, #tpu.memory_space<vmem>>, vector<1x1x4x32xf32>
    %24 = vector.shape_cast %23 : vector<1x1x4x32xf32> to vector<4x32xf32>
    %c0_38 = arith.constant 0 : index
    %c289_39 = arith.constant 289 : index
    %25 = vector.load %arg15[%c0_38, %c289_39] : memref<4x322xf32, #tpu.memory_space<vmem>>, vector<4x32xf32>
    tpu.vector_store %arg15[%c0_38, %c289_39], %24 {strides = array<i32>} : memref<4x322xf32, #tpu.memory_space<vmem>>, vector<4x32xf32>,
    %c0_40 = arith.constant 0 : index
    %c0_41 = arith.constant 0 : index
    %26 = vector.load %arg2[%c0_40, %c0_41] : memref<1x256xf32, #tpu.memory_space<vmem>>, vector<1x256xf32>
    %c0_42 = arith.constant 0 : index
    %c0_43 = arith.constant 0 : index
    %27 = vector.load %arg3[%c0_42, %c0_43] : memref<1x256xf32, #tpu.memory_space<vmem>>, vector<1x256xf32>
    %cst_44 = arith.constant 0.000000e+00 : f32
    %28 = vector.broadcast %cst_44 : f32 to vector<4x256xf32>
    %c0_45 = arith.constant 0 : index
    %c0_46 = arith.constant 0 : index
    %c0_47 = arith.constant 0 : index
    %29 = vector.load %arg4[%c0_45, %c0_46, %c0_47] : memref<9x4x6xf32, #tpu.memory_space<vmem>>, vector<1x4x6xf32>
    %30 = vector.shape_cast %29 : vector<1x4x6xf32> to vector<4x6xf32>
    %c0_48 = arith.constant 0 : index
    %c0_49 = arith.constant 0 : index
    %31 = vector.load %arg14[%c0_48, %c0_49] : memref<6x322xf32, #tpu.memory_space<vmem>>, vector<6x256xf32>
    %cst_50 = arith.constant dense<0.000000e+00> : vector<4x256xf32>
    %32 = tpu.matmul %30, %31, %cst_50 {dimension_numbers = #tpu.dot_dimension_numbers<[1], [0], [0], [1], [0, 0, 1, 1], [], []>} : vector<4x6xf32>, vector<6x256xf32>, vector<4x256xf32> -> vector<4x256xf32>
    %c0_51 = arith.constant 0 : index
    %c0_52 = arith.constant 0 : index
    %c0_53 = arith.constant 0 : index
    %33 = vector.load %arg5[%c0_51, %c0_52, %c0_53] : memref<9x4x4xf32, #tpu.memory_space<vmem>>, vector<1x4x4xf32>
    %34 = vector.shape_cast %33 : vector<1x4x4xf32> to vector<4x4xf32>
    %c0_54 = arith.constant 0 : index
    %c0_55 = arith.constant 0 : index
    %35 = vector.load %arg15[%c0_54, %c0_55] : memref<4x322xf32, #tpu.memory_space<vmem>>, vector<4x256xf32>
    %cst_56 = arith.constant dense<0.000000e+00> : vector<4x256xf32>
    %36 = tpu.matmul %34, %35, %cst_56 {dimension_numbers = #tpu.dot_dimension_numbers<[1], [0], [0], [1], [0, 0, 1, 1], [], []>} : vector<4x4xf32>, vector<4x256xf32>, vector<4x256xf32> -> vector<4x256xf32>
    %37 = arith.addf %32, %36 : vector<4x256xf32>
    %38 = vector.broadcast %26 : vector<1x256xf32> to vector<4x256xf32>
    %39 = arith.mulf %37, %38 : vector<4x256xf32>
    %40 = arith.addf %28, %39 : vector<4x256xf32>
    %c1_57 = arith.constant 1 : index
    %c0_58 = arith.constant 0 : index
    %c0_59 = arith.constant 0 : index
    %41 = vector.load %arg4[%c1_57, %c0_58, %c0_59] : memref<9x4x6xf32, #tpu.memory_space<vmem>>, vector<1x4x6xf32>
    %42 = vector.shape_cast %41 : vector<1x4x6xf32> to vector<4x6xf32>
    %c0_60 = arith.constant 0 : index
    %c1_61 = arith.constant 1 : index
    %43 = vector.load %arg14[%c0_60, %c1_61] : memref<6x322xf32, #tpu.memory_space<vmem>>, vector<6x256xf32>
    %cst_62 = arith.constant dense<0.000000e+00> : vector<4x256xf32>
    %44 = tpu.matmul %42, %43, %cst_62 {dimension_numbers = #tpu.dot_dimension_numbers<[1], [0], [0], [1], [0, 0, 1, 1], [], []>} : vector<4x6xf32>, vector<6x256xf32>, vector<4x256xf32> -> vector<4x256xf32>
    %c1_63 = arith.constant 1 : index
    %c0_64 = arith.constant 0 : index
    %c0_65 = arith.constant 0 : index
    %45 = vector.load %arg5[%c1_63, %c0_64, %c0_65] : memref<9x4x4xf32, #tpu.memory_space<vmem>>, vector<1x4x4xf32>
    %46 = vector.shape_cast %45 : vector<1x4x4xf32> to vector<4x4xf32>
    %c0_66 = arith.constant 0 : index
    %c1_67 = arith.constant 1 : index
    %47 = vector.load %arg15[%c0_66, %c1_67] : memref<4x322xf32, #tpu.memory_space<vmem>>, vector<4x256xf32>
    %cst_68 = arith.constant dense<0.000000e+00> : vector<4x256xf32>
    %48 = tpu.matmul %46, %47, %cst_68 {dimension_numbers = #tpu.dot_dimension_numbers<[1], [0], [0], [1], [0, 0, 1, 1], [], []>} : vector<4x4xf32>, vector<4x256xf32>, vector<4x256xf32> -> vector<4x256xf32>
    %49 = arith.addf %44, %48 : vector<4x256xf32>
    %50 = arith.addf %40, %49 : vector<4x256xf32>
    %c2 = arith.constant 2 : index
    %c0_69 = arith.constant 0 : index
    %c0_70 = arith.constant 0 : index
    %51 = vector.load %arg4[%c2, %c0_69, %c0_70] : memref<9x4x6xf32, #tpu.memory_space<vmem>>, vector<1x4x6xf32>
    %52 = vector.shape_cast %51 : vector<1x4x6xf32> to vector<4x6xf32>
    %c0_71 = arith.constant 0 : index
    %c2_72 = arith.constant 2 : index
    %53 = vector.load %arg14[%c0_71, %c2_72] : memref<6x322xf32, #tpu.memory_space<vmem>>, vector<6x256xf32>
    %cst_73 = arith.constant dense<0.000000e+00> : vector<4x256xf32>
    %54 = tpu.matmul %52, %53, %cst_73 {dimension_numbers = #tpu.dot_dimension_numbers<[1], [0], [0], [1], [0, 0, 1, 1], [], []>} : vector<4x6xf32>, vector<6x256xf32>, vector<4x256xf32> -> vector<4x256xf32>
    %c2_74 = arith.constant 2 : index
    %c0_75 = arith.constant 0 : index
    %c0_76 = arith.constant 0 : index
    %55 = vector.load %arg5[%c2_74, %c0_75, %c0_76] : memref<9x4x4xf32, #tpu.memory_space<vmem>>, vector<1x4x4xf32>
    %56 = vector.shape_cast %55 : vector<1x4x4xf32> to vector<4x4xf32>
    %c0_77 = arith.constant 0 : index
    %c2_78 = arith.constant 2 : index
    %57 = vector.load %arg15[%c0_77, %c2_78] : memref<4x322xf32, #tpu.memory_space<vmem>>, vector<4x256xf32>
    %cst_79 = arith.constant dense<0.000000e+00> : vector<4x256xf32>
    %58 = tpu.matmul %56, %57, %cst_79 {dimension_numbers = #tpu.dot_dimension_numbers<[1], [0], [0], [1], [0, 0, 1, 1], [], []>} : vector<4x4xf32>, vector<4x256xf32>, vector<4x256xf32> -> vector<4x256xf32>
    %59 = arith.addf %54, %58 : vector<4x256xf32>
    %60 = vector.broadcast %27 : vector<1x256xf32> to vector<4x256xf32>
    %61 = arith.mulf %59, %60 : vector<4x256xf32>
    %62 = arith.addf %50, %61 : vector<4x256xf32>
    %c3 = arith.constant 3 : index
    %c0_80 = arith.constant 0 : index
    %c0_81 = arith.constant 0 : index
    %63 = vector.load %arg4[%c3, %c0_80, %c0_81] : memref<9x4x6xf32, #tpu.memory_space<vmem>>, vector<1x4x6xf32>
    %64 = vector.shape_cast %63 : vector<1x4x6xf32> to vector<4x6xf32>
    %c0_82 = arith.constant 0 : index
    %c32 = arith.constant 32 : index
    %65 = vector.load %arg14[%c0_82, %c32] : memref<6x322xf32, #tpu.memory_space<vmem>>, vector<6x256xf32>
    %cst_83 = arith.constant dense<0.000000e+00> : vector<4x256xf32>
    %66 = tpu.matmul %64, %65, %cst_83 {dimension_numbers = #tpu.dot_dimension_numbers<[1], [0], [0], [1], [0, 0, 1, 1], [], []>} : vector<4x6xf32>, vector<6x256xf32>, vector<4x256xf32> -> vector<4x256xf32>
    %c3_84 = arith.constant 3 : index
    %c0_85 = arith.constant 0 : index
    %c0_86 = arith.constant 0 : index
    %67 = vector.load %arg5[%c3_84, %c0_85, %c0_86] : memref<9x4x4xf32, #tpu.memory_space<vmem>>, vector<1x4x4xf32>
    %68 = vector.shape_cast %67 : vector<1x4x4xf32> to vector<4x4xf32>
    %c0_87 = arith.constant 0 : index
    %c32_88 = arith.constant 32 : index
    %69 = vector.load %arg15[%c0_87, %c32_88] : memref<4x322xf32, #tpu.memory_space<vmem>>, vector<4x256xf32>
    %cst_89 = arith.constant dense<0.000000e+00> : vector<4x256xf32>
    %70 = tpu.matmul %68, %69, %cst_89 {dimension_numbers = #tpu.dot_dimension_numbers<[1], [0], [0], [1], [0, 0, 1, 1], [], []>} : vector<4x4xf32>, vector<4x256xf32>, vector<4x256xf32> -> vector<4x256xf32>
    %71 = arith.addf %66, %70 : vector<4x256xf32>
    %72 = vector.broadcast %26 : vector<1x256xf32> to vector<4x256xf32>
    %73 = arith.mulf %71, %72 : vector<4x256xf32>
    %74 = arith.addf %62, %73 : vector<4x256xf32>
    %c4 = arith.constant 4 : index
    %c0_90 = arith.constant 0 : index
    %c0_91 = arith.constant 0 : index
    %75 = vector.load %arg4[%c4, %c0_90, %c0_91] : memref<9x4x6xf32, #tpu.memory_space<vmem>>, vector<1x4x6xf32>
    %76 = vector.shape_cast %75 : vector<1x4x6xf32> to vector<4x6xf32>
    %c0_92 = arith.constant 0 : index
    %c33_93 = arith.constant 33 : index
    %77 = vector.load %arg14[%c0_92, %c33_93] : memref<6x322xf32, #tpu.memory_space<vmem>>, vector<6x256xf32>
    %cst_94 = arith.constant dense<0.000000e+00> : vector<4x256xf32>
    %78 = tpu.matmul %76, %77, %cst_94 {dimension_numbers = #tpu.dot_dimension_numbers<[1], [0], [0], [1], [0, 0, 1, 1], [], []>} : vector<4x6xf32>, vector<6x256xf32>, vector<4x256xf32> -> vector<4x256xf32>
    %c4_95 = arith.constant 4 : index
    %c0_96 = arith.constant 0 : index
    %c0_97 = arith.constant 0 : index
    %79 = vector.load %arg5[%c4_95, %c0_96, %c0_97] : memref<9x4x4xf32, #tpu.memory_space<vmem>>, vector<1x4x4xf32>
    %80 = vector.shape_cast %79 : vector<1x4x4xf32> to vector<4x4xf32>
    %c0_98 = arith.constant 0 : index
    %c33_99 = arith.constant 33 : index
    %81 = vector.load %arg15[%c0_98, %c33_99] : memref<4x322xf32, #tpu.memory_space<vmem>>, vector<4x256xf32>
    %cst_100 = arith.constant dense<0.000000e+00> : vector<4x256xf32>
    %82 = tpu.matmul %80, %81, %cst_100 {dimension_numbers = #tpu.dot_dimension_numbers<[1], [0], [0], [1], [0, 0, 1, 1], [], []>} : vector<4x4xf32>, vector<4x256xf32>, vector<4x256xf32> -> vector<4x256xf32>
    %83 = arith.addf %78, %82 : vector<4x256xf32>
    %84 = arith.addf %74, %83 : vector<4x256xf32>
    %c5 = arith.constant 5 : index
    %c0_101 = arith.constant 0 : index
    %c0_102 = arith.constant 0 : index
    %85 = vector.load %arg4[%c5, %c0_101, %c0_102] : memref<9x4x6xf32, #tpu.memory_space<vmem>>, vector<1x4x6xf32>
    %86 = vector.shape_cast %85 : vector<1x4x6xf32> to vector<4x6xf32>
    %c0_103 = arith.constant 0 : index
    %c34 = arith.constant 34 : index
    %87 = vector.load %arg14[%c0_103, %c34] : memref<6x322xf32, #tpu.memory_space<vmem>>, vector<6x256xf32>
    %cst_104 = arith.constant dense<0.000000e+00> : vector<4x256xf32>
    %88 = tpu.matmul %86, %87, %cst_104 {dimension_numbers = #tpu.dot_dimension_numbers<[1], [0], [0], [1], [0, 0, 1, 1], [], []>} : vector<4x6xf32>, vector<6x256xf32>, vector<4x256xf32> -> vector<4x256xf32>
    %c5_105 = arith.constant 5 : index
    %c0_106 = arith.constant 0 : index
    %c0_107 = arith.constant 0 : index
    %89 = vector.load %arg5[%c5_105, %c0_106, %c0_107] : memref<9x4x4xf32, #tpu.memory_space<vmem>>, vector<1x4x4xf32>
    %90 = vector.shape_cast %89 : vector<1x4x4xf32> to vector<4x4xf32>
    %c0_108 = arith.constant 0 : index
    %c34_109 = arith.constant 34 : index
    %91 = vector.load %arg15[%c0_108, %c34_109] : memref<4x322xf32, #tpu.memory_space<vmem>>, vector<4x256xf32>
    %cst_110 = arith.constant dense<0.000000e+00> : vector<4x256xf32>
    %92 = tpu.matmul %90, %91, %cst_110 {dimension_numbers = #tpu.dot_dimension_numbers<[1], [0], [0], [1], [0, 0, 1, 1], [], []>} : vector<4x4xf32>, vector<4x256xf32>, vector<4x256xf32> -> vector<4x256xf32>
    %93 = arith.addf %88, %92 : vector<4x256xf32>
    %94 = vector.broadcast %27 : vector<1x256xf32> to vector<4x256xf32>
    %95 = arith.mulf %93, %94 : vector<4x256xf32>
    %96 = arith.addf %84, %95 : vector<4x256xf32>
    %c6 = arith.constant 6 : index
    %c0_111 = arith.constant 0 : index
    %c0_112 = arith.constant 0 : index
    %97 = vector.load %arg4[%c6, %c0_111, %c0_112] : memref<9x4x6xf32, #tpu.memory_space<vmem>>, vector<1x4x6xf32>
    %98 = vector.shape_cast %97 : vector<1x4x6xf32> to vector<4x6xf32>
    %c0_113 = arith.constant 0 : index
    %c64 = arith.constant 64 : index
    %99 = vector.load %arg14[%c0_113, %c64] : memref<6x322xf32, #tpu.memory_space<vmem>>, vector<6x256xf32>
    %cst_114 = arith.constant dense<0.000000e+00> : vector<4x256xf32>
    %100 = tpu.matmul %98, %99, %cst_114 {dimension_numbers = #tpu.dot_dimension_numbers<[1], [0], [0], [1], [0, 0, 1, 1], [], []>} : vector<4x6xf32>, vector<6x256xf32>, vector<4x256xf32> -> vector<4x256xf32>
    %c6_115 = arith.constant 6 : index
    %c0_116 = arith.constant 0 : index
    %c0_117 = arith.constant 0 : index
    %101 = vector.load %arg5[%c6_115, %c0_116, %c0_117] : memref<9x4x4xf32, #tpu.memory_space<vmem>>, vector<1x4x4xf32>
    %102 = vector.shape_cast %101 : vector<1x4x4xf32> to vector<4x4xf32>
    %c0_118 = arith.constant 0 : index
    %c64_119 = arith.constant 64 : index
    %103 = vector.load %arg15[%c0_118, %c64_119] : memref<4x322xf32, #tpu.memory_space<vmem>>, vector<4x256xf32>
    %cst_120 = arith.constant dense<0.000000e+00> : vector<4x256xf32>
    %104 = tpu.matmul %102, %103, %cst_120 {dimension_numbers = #tpu.dot_dimension_numbers<[1], [0], [0], [1], [0, 0, 1, 1], [], []>} : vector<4x4xf32>, vector<4x256xf32>, vector<4x256xf32> -> vector<4x256xf32>
    %105 = arith.addf %100, %104 : vector<4x256xf32>
    %106 = vector.broadcast %26 : vector<1x256xf32> to vector<4x256xf32>
    %107 = arith.mulf %105, %106 : vector<4x256xf32>
    %108 = arith.addf %96, %107 : vector<4x256xf32>
    %c7 = arith.constant 7 : index
    %c0_121 = arith.constant 0 : index
    %c0_122 = arith.constant 0 : index
    %109 = vector.load %arg4[%c7, %c0_121, %c0_122] : memref<9x4x6xf32, #tpu.memory_space<vmem>>, vector<1x4x6xf32>
    %110 = vector.shape_cast %109 : vector<1x4x6xf32> to vector<4x6xf32>
    %c0_123 = arith.constant 0 : index
    %c65 = arith.constant 65 : index
    %111 = vector.load %arg14[%c0_123, %c65] : memref<6x322xf32, #tpu.memory_space<vmem>>, vector<6x256xf32>
    %cst_124 = arith.constant dense<0.000000e+00> : vector<4x256xf32>
    %112 = tpu.matmul %110, %111, %cst_124 {dimension_numbers = #tpu.dot_dimension_numbers<[1], [0], [0], [1], [0, 0, 1, 1], [], []>} : vector<4x6xf32>, vector<6x256xf32>, vector<4x256xf32> -> vector<4x256xf32>
    %c7_125 = arith.constant 7 : index
    %c0_126 = arith.constant 0 : index
    %c0_127 = arith.constant 0 : index
    %113 = vector.load %arg5[%c7_125, %c0_126, %c0_127] : memref<9x4x4xf32, #tpu.memory_space<vmem>>, vector<1x4x4xf32>
    %114 = vector.shape_cast %113 : vector<1x4x4xf32> to vector<4x4xf32>
    %c0_128 = arith.constant 0 : index
    %c65_129 = arith.constant 65 : index
    %115 = vector.load %arg15[%c0_128, %c65_129] : memref<4x322xf32, #tpu.memory_space<vmem>>, vector<4x256xf32>
    %cst_130 = arith.constant dense<0.000000e+00> : vector<4x256xf32>
    %116 = tpu.matmul %114, %115, %cst_130 {dimension_numbers = #tpu.dot_dimension_numbers<[1], [0], [0], [1], [0, 0, 1, 1], [], []>} : vector<4x4xf32>, vector<4x256xf32>, vector<4x256xf32> -> vector<4x256xf32>
    %117 = arith.addf %112, %116 : vector<4x256xf32>
    %118 = arith.addf %108, %117 : vector<4x256xf32>
    %c8 = arith.constant 8 : index
    %c0_131 = arith.constant 0 : index
    %c0_132 = arith.constant 0 : index
    %119 = vector.load %arg4[%c8, %c0_131, %c0_132] : memref<9x4x6xf32, #tpu.memory_space<vmem>>, vector<1x4x6xf32>
    %120 = vector.shape_cast %119 : vector<1x4x6xf32> to vector<4x6xf32>
    %c0_133 = arith.constant 0 : index
    %c66 = arith.constant 66 : index
    %121 = vector.load %arg14[%c0_133, %c66] : memref<6x322xf32, #tpu.memory_space<vmem>>, vector<6x256xf32>
    %cst_134 = arith.constant dense<0.000000e+00> : vector<4x256xf32>
    %122 = tpu.matmul %120, %121, %cst_134 {dimension_numbers = #tpu.dot_dimension_numbers<[1], [0], [0], [1], [0, 0, 1, 1], [], []>} : vector<4x6xf32>, vector<6x256xf32>, vector<4x256xf32> -> vector<4x256xf32>
    %c8_135 = arith.constant 8 : index
    %c0_136 = arith.constant 0 : index
    %c0_137 = arith.constant 0 : index
    %123 = vector.load %arg5[%c8_135, %c0_136, %c0_137] : memref<9x4x4xf32, #tpu.memory_space<vmem>>, vector<1x4x4xf32>
    %124 = vector.shape_cast %123 : vector<1x4x4xf32> to vector<4x4xf32>
    %c0_138 = arith.constant 0 : index
    %c66_139 = arith.constant 66 : index
    %125 = vector.load %arg15[%c0_138, %c66_139] : memref<4x322xf32, #tpu.memory_space<vmem>>, vector<4x256xf32>
    %cst_140 = arith.constant dense<0.000000e+00> : vector<4x256xf32>
    %126 = tpu.matmul %124, %125, %cst_140 {dimension_numbers = #tpu.dot_dimension_numbers<[1], [0], [0], [1], [0, 0, 1, 1], [], []>} : vector<4x4xf32>, vector<4x256xf32>, vector<4x256xf32> -> vector<4x256xf32>
    %127 = arith.addf %122, %126 : vector<4x256xf32>
    %128 = vector.broadcast %27 : vector<1x256xf32> to vector<4x256xf32>
    %129 = arith.mulf %127, %128 : vector<4x256xf32>
    %130 = arith.addf %118, %129 : vector<4x256xf32>
    %c0_141 = arith.constant 0 : index
    %c0_142 = arith.constant 0 : index
    %131 = vector.load %arg6[%c0_141, %c0_142] : memref<4x1xf32, #tpu.memory_space<vmem>>, vector<4x1xf32>
    %132 = vector.broadcast %131 : vector<4x1xf32> to vector<4x256xf32>
    %133 = arith.addf %130, %132 : vector<4x256xf32>
    %134 = arith.negf %133 : vector<4x256xf32>
    %135 = math.exp %134 : vector<4x256xf32>
    %cst_143 = arith.constant 1.000000e+00 : f32
    %136 = vector.broadcast %cst_143 : f32 to vector<4x256xf32>
    %137 = arith.addf %136, %135 : vector<4x256xf32>
    %138 = arith.divf %136, %137 : vector<4x256xf32>
    %c0_144 = arith.constant 0 : index
    %c0_145 = arith.constant 0 : index
    %c0_146 = arith.constant 0 : index
    %139 = vector.load %arg13[%c0_144, %c0_145, %c0_146] : memref<1x4x256xf32, #tpu.memory_space<vmem>>, vector<1x4x256xf32>
    %140 = vector.shape_cast %139 : vector<1x4x256xf32> to vector<4x256xf32>
    %141 = vector.shape_cast %138 : vector<4x256xf32> to vector<1x4x256xf32>
    tpu.vector_store %arg13[%c0_144, %c0_145, %c0_146], %141 {strides = array<i32>} : memref<1x4x256xf32, #tpu.memory_space<vmem>>, vector<1x4x256xf32>,
    return
  }
  func.func @transform_0(%arg0: i32, %arg1: i32) -> (i32, i32) {
    %c0_i32 = arith.constant 0 : i32
    %c0_i32_0 = arith.constant 0 : i32
    %c0_i32_1 = arith.constant 0 : i32
    return %c0_i32, %c0_i32_0 : i32, i32
  }
  func.func @transform_1(%arg0: i32, %arg1: i32) -> (i32, i32) {
    %c0_i32 = arith.constant 0 : i32
    %c0_i32_0 = arith.constant 0 : i32
    %c0_i32_1 = arith.constant 0 : i32
    return %c0_i32, %c0_i32_0 : i32, i32
  }
  func.func @transform_2(%arg0: i32, %arg1: i32) -> (i32, i32, i32) {
    %c0_i32 = arith.constant 0 : i32
    %c0_i32_0 = arith.constant 0 : i32
    %c0_i32_1 = arith.constant 0 : i32
    %c0_i32_2 = arith.constant 0 : i32
    return %c0_i32, %c0_i32_0, %c0_i32_1 : i32, i32, i32
  }
  func.func @transform_3(%arg0: i32, %arg1: i32) -> (i32, i32, i32) {
    %c0_i32 = arith.constant 0 : i32
    %c0_i32_0 = arith.constant 0 : i32
    %c0_i32_1 = arith.constant 0 : i32
    %c0_i32_2 = arith.constant 0 : i32
    return %c0_i32, %c0_i32_0, %c0_i32_1 : i32, i32, i32
  }
  func.func @transform_4(%arg0: i32, %arg1: i32) -> (i32, i32) {
    %c0_i32 = arith.constant 0 : i32
    %c0_i32_0 = arith.constant 0 : i32
    %c0_i32_1 = arith.constant 0 : i32
    return %c0_i32, %c0_i32_0 : i32, i32
  }
  func.func @transform_5(%arg0: i32, %arg1: i32) -> (i32, i32, i32) {
    %c0_i32 = arith.constant 0 : i32
    %c0_i32_0 = arith.constant 0 : i32
    return %arg0, %c0_i32, %arg1 : i32, i32, i32
  }
  func.func @transform_6(%arg0: i32, %arg1: i32) -> (i32, i32, i32, i32) {
    %c0_i32 = arith.constant 0 : i32
    %c0_i32_0 = arith.constant 0 : i32
    %c0_i32_1 = arith.constant 0 : i32
    return %arg0, %arg1, %c0_i32, %c0_i32_0 : i32, i32, i32, i32
  }
  func.func @transform_7(%arg0: i32, %arg1: i32) -> (i32, i32, i32, i32) {
    %c0_i32 = arith.constant 0 : i32
    %c0_i32_0 = arith.constant 0 : i32
    %c0_i32_1 = arith.constant 0 : i32
    return %arg0, %arg1, %c0_i32, %c0_i32_0 : i32, i32, i32, i32
  }
  func.func @transform_8(%arg0: i32, %arg1: i32) -> (i32, i32, i32) {
    %c0_i32 = arith.constant 0 : i32
    %c0_i32_0 = arith.constant 0 : i32
    return %arg0, %c0_i32, %arg1 : i32, i32, i32
  }
  func.func @transform_9(%arg0: i32, %arg1: i32) -> (i32, i32, i32, i32) {
    %c0_i32 = arith.constant 0 : i32
    %c0_i32_0 = arith.constant 0 : i32
    %c0_i32_1 = arith.constant 0 : i32
    return %arg0, %arg1, %c0_i32, %c0_i32_0 : i32, i32, i32, i32
  }
  func.func @transform_10(%arg0: i32, %arg1: i32) -> (i32, i32, i32, i32) {
    %c0_i32 = arith.constant 0 : i32
    %c0_i32_0 = arith.constant 0 : i32
    %c0_i32_1 = arith.constant 0 : i32
    return %arg0, %arg1, %c0_i32, %c0_i32_0 : i32, i32, i32, i32
  }
  func.func @transform_11(%arg0: i32, %arg1: i32) -> (i32, i32, i32) {
    %c0_i32 = arith.constant 0 : i32
    %c0_i32_0 = arith.constant 0 : i32
    return %arg0, %c0_i32, %arg1 : i32, i32, i32
  }
}

</mosaic_0001>

<llo_original>
// kernel: unet_out_up_pallas.1
$region0: #{unet_out_up_pallas.1}
  #allocation0 [shape = 'u32[]', space=smem, size = 0x4, offset = 0x4, fixed_abs, tag = 'smem constant byte address 0x4 - core index']
  #allocation1 [shape = 'u32[144,128]{1,0:T(1,128)}', space=vmem, size = 0x12000, scoped, tag = 'internal scratch']
  #allocation2 [shape = 'f32[6,322]{1,0:T(8,128)}', space=vmem, size = 0x3000, scoped, tag = 'scratch operand']
  #allocation3 [shape = 'f32[4,322]{1,0:T(4,128)}', space=vmem, size = 0x1800, scoped, tag = 'scratch operand']
  %s0 = inlined_call_operand.vmem [shape: f32[1,256], index: 0, kind: input, shape index: {}]
  %s1 = inlined_call_operand.vmem [shape: f32[1,256], index: 1, kind: input, shape index: {}]
  %s2 = inlined_call_operand.vmem [shape: f32[9,4,6], index: 2, kind: input, shape index: {}]
  %s3 = inlined_call_operand.vmem [shape: f32[9,4,4], index: 3, kind: input, shape index: {}]
  %s4 = inlined_call_operand.vmem [shape: f32[4,1], index: 4, kind: input, shape index: {}]
  %s5 = inlined_call_operand.vmem [shape: f32[2,6,1024], index: 5, kind: input, shape index: {}]
  %s6 = inlined_call_operand.vmem [shape: f32[2,4,6,32], index: 6, kind: input, shape index: {}]
  %s7 = inlined_call_operand.vmem [shape: f32[2,4,6,32], index: 7, kind: input, shape index: {}]
  %s8 = inlined_call_operand.vmem [shape: f32[2,4,1024], index: 8, kind: input, shape index: {}]
  %s9 = inlined_call_operand.vmem [shape: f32[2,4,4,32], index: 9, kind: input, shape index: {}]
  %s10 = inlined_call_operand.vmem [shape: f32[2,4,4,32], index: 10, kind: input, shape index: {}]
  %s11 = inlined_call_operand.vmem [shape: f32[2,4,1024], index: 11, kind: output, shape index: {}]
  %s12 = sld [smem:[#allocation0]]
  $region77: #{unet_out_up_pallas.1} parent=0
    _
  %s14 = ssub.s32 1, %s12
  %s15 = scalar_select 0, %s14, %s12
  loop: start=0, step=1, limit=10
  $region2: #{unet_out_up_pallas.1} parent=0 // loop_pre_header
    _
  $region3: #{unet_out_up_pallas.1} parent=0 // loop_header
    %s17 = sphi 0, %s21
    %p18 = scmp.ge.s32.totalorder %s17, 10
    %s24 = sphi 0, %s36
    %s25 = sphi 0, %s32
    %s26 = sphi 0, %s24
    %s27 = sphi 0, %s25
    %s28 = sphi 0, %s26
    %s29 = sphi 0, %s27
    %s37 = sphi 0, %s37
    %s39 = sphi 0, %s37
    %s40 = sphi 0, %s39
    %s54 = sphi 0, %s40
    %s58 = sphi 0, %s58
    %s60 = sphi 0, %s58
    %s61 = sphi 0, %s60
    %s75 = sphi 0, %s61
    %s79 = sphi 0, %s79
    %s81 = sphi 0, %s79
    %s82 = sphi 0, %s81
    %s96 = sphi 0, %s82
    %s100 = sphi 0, %s100
    %s102 = sphi 0, %s100
    %s103 = sphi 0, %s102
    %s117 = sphi 0, %s103
    %s121 = sphi 0, %s121
    %s123 = sphi 0, %s121
    %s124 = sphi 0, %s123
    %s138 = sphi 0, %s124
    %s146 = sphi 0, %s148
    %s149 = sphi 0, %s146
    %s150 = sphi 0, %s149
    %s166 = sphi 0, %s150
    %s174 = sphi 0, %s176
    %s177 = sphi 0, %s174
    %s178 = sphi 0, %s177
    %s194 = sphi 0, %s178
    %s202 = sphi 0, %s204
    %s205 = sphi 0, %s202
    %s206 = sphi 0, %s205
    %s222 = sphi 0, %s206
    %s230 = sphi 0, %s232
    %s233 = sphi 0, %s230
    %s234 = sphi 0, %s233
    %s250 = sphi 0, %s234
    %s258 = sphi 0, %s260
    %s261 = sphi 0, %s258
    %s262 = sphi 0, %s261
    %s278 = sphi 0, %s262
    %s286 = sphi 0, %s288
    %s289 = sphi 0, %s286
    %s290 = sphi 0, %s289
    %s306 = sphi 0, %s290
    %s314 = sphi 0, %s316
    %s317 = sphi 0, %s314
    %s318 = sphi 0, %s317
    %s334 = sphi 0, %s318
  $region4: #{unet_out_up_pallas.1} parent=0 // loop_header_branch
    %20 = sbr.rel (%p18) target = $region8
  $region5: #{unet_out_up_pallas.1} parent=0 // loop_body
    %s22 = ssub.s32 %s17, 1
    %s23 = ssub.s32 %s17, 2
    %s30 = sadd.s32 1, %s25
    %p31 = scmp.ge.s32.totalorder %s30, 4
    %s32 = scalar_select %p31, 0, %s30
    %s33 = sadd.s32 1, %s24
    %s34 = scalar_select %p31, %s33, %s24
    %p35 = scmp.ge.s32.totalorder %s34, 2
    %s36 = scalar_select %p35, 0, %s34
    %s38 = sadd.s32 %s37, 1
    %p41 = scmp.eq.s32.totalorder %s17, 7
    %p42 = scmp.ne.s32.totalorder %s37, %s39
    %p43 = scmp.eq.s32.totalorder %s17, 0
    %p44 = por %p42, %p43
    %p45 = scmp.ne.s32.totalorder %s37, %s39
    %p46 = scmp.eq.s32.totalorder %s22, 7
    %p47 = por %p45, %p46
    %p48 = scmp.ne.s32.totalorder %s39, %s40
    %p49 = scmp.eq.s32.totalorder %s22, 0
    %p50 = por %p48, %p49
    %p51 = scmp.ne.s32.totalorder %s39, %s40
    %p52 = scmp.eq.s32.totalorder %s23, 7
    %p53 = por %p51, %p52
    %p55 = scmp.ne.s32.totalorder %s40, %s54
    %p56 = scmp.eq.s32.totalorder %s23, 0
    %p57 = por %p55, %p56
    %s59 = sadd.s32 %s58, 1
    %p62 = scmp.eq.s32.totalorder %s17, 7
    %p63 = scmp.ne.s32.totalorder %s58, %s60
    %p64 = scmp.eq.s32.totalorder %s17, 0
    %p65 = por %p63, %p64
    %p66 = scmp.ne.s32.totalorder %s58, %s60
    %p67 = scmp.eq.s32.totalorder %s22, 7
    %p68 = por %p66, %p67
    %p69 = scmp.ne.s32.totalorder %s60, %s61
    %p70 = scmp.eq.s32.totalorder %s22, 0
    %p71 = por %p69, %p70
    %p72 = scmp.ne.s32.totalorder %s60, %s61
    %p73 = scmp.eq.s32.totalorder %s23, 7
    %p74 = por %p72, %p73
    %p76 = scmp.ne.s32.totalorder %s61, %s75
    %p77 = scmp.eq.s32.totalorder %s23, 0
    %p78 = por %p76, %p77
    %s80 = sadd.s32 %s79, 1
    %p83 = scmp.eq.s32.totalorder %s17, 7
    %p84 = scmp.ne.s32.totalorder %s79, %s81
    %p85 = scmp.eq.s32.totalorder %s17, 0
    %p86 = por %p84, %p85
    %p87 = scmp.ne.s32.totalorder %s79, %s81
    %p88 = scmp.eq.s32.totalorder %s22, 7
    %p89 = por %p87, %p88
    %p90 = scmp.ne.s32.totalorder %s81, %s82
    %p91 = scmp.eq.s32.totalorder %s22, 0
    %p92 = por %p90, %p91
    %p93 = scmp.ne.s32.totalorder %s81, %s82
    %p94 = scmp.eq.s32.totalorder %s23, 7
    %p95 = por %p93, %p94
    %p97 = scmp.ne.s32.totalorder %s82, %s96
    %p98 = scmp.eq.s32.totalorder %s23, 0
    %p99 = por %p97, %p98
    %s101 = sadd.s32 %s100, 1
    %p104 = scmp.eq.s32.totalorder %s17, 7
    %p105 = scmp.ne.s32.totalorder %s100, %s102
    %p106 = scmp.eq.s32.totalorder %s17, 0
    %p107 = por %p105, %p106
    %p108 = scmp.ne.s32.totalorder %s100, %s102
    %p109 = scmp.eq.s32.totalorder %s22, 7
    %p110 = por %p108, %p109
    %p111 = scmp.ne.s32.totalorder %s102, %s103
    %p112 = scmp.eq.s32.totalorder %s22, 0
    %p113 = por %p111, %p112
    %p114 = scmp.ne.s32.totalorder %s102, %s103
    %p115 = scmp.eq.s32.totalorder %s23, 7
    %p116 = por %p114, %p115
    %p118 = scmp.ne.s32.totalorder %s103, %s117
    %p119 = scmp.eq.s32.totalorder %s23, 0
    %p120 = por %p118, %p119
    %s122 = sadd.s32 %s121, 1
    %p125 = scmp.eq.s32.totalorder %s17, 7
    %p126 = scmp.ne.s32.totalorder %s121, %s123
    %p127 = scmp.eq.s32.totalorder %s17, 0
    %p128 = por %p126, %p127
    %p129 = scmp.ne.s32.totalorder %s121, %s123
    %p130 = scmp.eq.s32.totalorder %s22, 7
    %p131 = por %p129, %p130
    %p132 = scmp.ne.s32.totalorder %s123, %s124
    %p133 = scmp.eq.s32.totalorder %s22, 0
    %p134 = por %p132, %p133
    %p135 = scmp.ne.s32.totalorder %s123, %s124
    %p136 = scmp.eq.s32.totalorder %s23, 7
    %p137 = por %p135, %p136
    %p139 = scmp.ne.s32.totalorder %s124, %s138
    %p140 = scmp.eq.s32.totalorder %s23, 0
    %p141 = por %p139, %p140
    %s142 = ssub.s32 %s24, %s36
    %s143 = ssub.s32 %s25, %s32
    %s144 = sor.u32 %s142, %s143
    %p145 = scmp.eq.s32.totalorder %s144, 0
    %s147 = sadd.s32 %s146, 1
    %s148 = scalar_select %p145, %s146, %s147
    %p151 = pneg %p145
    %p152 = scmp.eq.s32.totalorder %s17, 7
    %p153 = por %p151, %p152
    %p154 = scmp.ne.s32.totalorder %s146, %s149
    %p155 = scmp.eq.s32.totalorder %s17, 0
    %p156 = por %p154, %p155
    %p157 = scmp.ne.s32.totalorder %s146, %s149
    %p158 = scmp.eq.s32.totalorder %s22, 7
    %p159 = por %p157, %p158
    %p160 = scmp.ne.s32.totalorder %s149, %s150
    %p161 = scmp.eq.s32.totalorder %s22, 0
    %p162 = por %p160, %p161
    %p163 = scmp.ne.s32.totalorder %s149, %s150
    %p164 = scmp.eq.s32.totalorder %s23, 7
    %p165 = por %p163, %p164
    %p167 = scmp.ne.s32.totalorder %s150, %s166
    %p168 = scmp.eq.s32.totalorder %s23, 0
    %p169 = por %p167, %p168
    %s170 = ssub.s32 %s24, %s36
    %s171 = ssub.s32 %s25, %s32
    %s172 = sor.u32 %s170, %s171
    %p173 = scmp.eq.s32.totalorder %s172, 0
    %s175 = sadd.s32 %s174, 1
    %s176 = scalar_select %p173, %s174, %s175
    %p179 = pneg %p173
    %p180 = scmp.eq.s32.totalorder %s17, 7
    %p181 = por %p179, %p180
    %p182 = scmp.ne.s32.totalorder %s174, %s177
    %p183 = scmp.eq.s32.totalorder %s17, 0
    %p184 = por %p182, %p183
    %p185 = scmp.ne.s32.totalorder %s174, %s177
    %p186 = scmp.eq.s32.totalorder %s22, 7
    %p187 = por %p185, %p186
    %p188 = scmp.ne.s32.totalorder %s177, %s178
    %p189 = scmp.eq.s32.totalorder %s22, 0
    %p190 = por %p188, %p189
    %p191 = scmp.ne.s32.totalorder %s177, %s178
    %p192 = scmp.eq.s32.totalorder %s23, 7
    %p193 = por %p191, %p192
    %p195 = scmp.ne.s32.totalorder %s178, %s194
    %p196 = scmp.eq.s32.totalorder %s23, 0
    %p197 = por %p195, %p196
    %s198 = ssub.s32 %s24, %s36
    %s199 = ssub.s32 %s25, %s32
    %s200 = sor.u32 %s198, %s199
    %p201 = scmp.eq.s32.totalorder %s200, 0
    %s203 = sadd.s32 %s202, 1
    %s204 = scalar_select %p201, %s202, %s203
    %p207 = pneg %p201
    %p208 = scmp.eq.s32.totalorder %s17, 7
    %p209 = por %p207, %p208
    %p210 = scmp.ne.s32.totalorder %s202, %s205
    %p211 = scmp.eq.s32.totalorder %s17, 0
    %p212 = por %p210, %p211
    %p213 = scmp.ne.s32.totalorder %s202, %s205
    %p214 = scmp.eq.s32.totalorder %s22, 7
    %p215 = por %p213, %p214
    %p216 = scmp.ne.s32.totalorder %s205, %s206
    %p217 = scmp.eq.s32.totalorder %s22, 0
    %p218 = por %p216, %p217
    %p219 = scmp.ne.s32.totalorder %s205, %s206
    %p220 = scmp.eq.s32.totalorder %s23, 7
    %p221 = por %p219, %p220
    %p223 = scmp.ne.s32.totalorder %s206, %s222
    %p224 = scmp.eq.s32.totalorder %s23, 0
    %p225 = por %p223, %p224
    %s226 = ssub.s32 %s24, %s36
    %s227 = ssub.s32 %s25, %s32
    %s228 = sor.u32 %s226, %s227
    %p229 = scmp.eq.s32.totalorder %s228, 0
    %s231 = sadd.s32 %s230, 1
    %s232 = scalar_select %p229, %s230, %s231
    %p235 = pneg %p229
    %p236 = scmp.eq.s32.totalorder %s17, 7
    %p237 = por %p235, %p236
    %p238 = scmp.ne.s32.totalorder %s230, %s233
    %p239 = scmp.eq.s32.totalorder %s17, 0
    %p240 = por %p238, %p239
    %p241 = scmp.ne.s32.totalorder %s230, %s233
    %p242 = scmp.eq.s32.totalorder %s22, 7
    %p243 = por %p241, %p242
    %p244 = scmp.ne.s32.totalorder %s233, %s234
    %p245 = scmp.eq.s32.totalorder %s22, 0
    %p246 = por %p244, %p245
    %p247 = scmp.ne.s32.totalorder %s233, %s234
    %p248 = scmp.eq.s32.totalorder %s23, 7
    %p249 = por %p247, %p248
    %p251 = scmp.ne.s32.totalorder %s234, %s250
    %p252 = scmp.eq.s32.totalorder %s23, 0
    %p253 = por %p251, %p252
    %s254 = ssub.s32 %s24, %s36
    %s255 = ssub.s32 %s25, %s32
    %s256 = sor.u32 %s254, %s255
    %p257 = scmp.eq.s32.totalorder %s256, 0
    %s259 = sadd.s32 %s258, 1
    %s260 = scalar_select %p257, %s258, %s259
    %p263 = pneg %p257
    %p264 = scmp.eq.s32.totalorder %s17, 7
    %p265 = por %p263, %p264
    %p266 = scmp.ne.s32.totalorder %s258, %s261
    %p267 = scmp.eq.s32.totalorder %s17, 0
    %p268 = por %p266, %p267
    %p269 = scmp.ne.s32.totalorder %s258, %s261
    %p270 = scmp.eq.s32.totalorder %s22, 7
    %p271 = por %p269, %p270
    %p272 = scmp.ne.s32.totalorder %s261, %s262
    %p273 = scmp.eq.s32.totalorder %s22, 0
    %p274 = por %p272, %p273
    %p275 = scmp.ne.s32.totalorder %s261, %s262
    %p276 = scmp.eq.s32.totalorder %s23, 7
    %p277 = por %p275, %p276
    %p279 = scmp.ne.s32.totalorder %s262, %s278
    %p280 = scmp.eq.s32.totalorder %s23, 0
    %p281 = por %p279, %p280
    %s282 = ssub.s32 %s24, %s36
    %s283 = ssub.s32 %s25, %s32
    %s284 = sor.u32 %s282, %s283
    %p285 = scmp.eq.s32.totalorder %s284, 0
    %s287 = sadd.s32 %s286, 1
    %s288 = scalar_select %p285, %s286, %s287
    %p291 = pneg %p285
    %p292 = scmp.eq.s32.totalorder %s17, 7
    %p293 = por %p291, %p292
    %p294 = scmp.ne.s32.totalorder %s286, %s289
    %p295 = scmp.eq.s32.totalorder %s17, 0
    %p296 = por %p294, %p295
    %p297 = scmp.ne.s32.totalorder %s286, %s289
    %p298 = scmp.eq.s32.totalorder %s22, 7
    %p299 = por %p297, %p298
    %p300 = scmp.ne.s32.totalorder %s289, %s290
    %p301 = scmp.eq.s32.totalorder %s22, 0
    %p302 = por %p300, %p301
    %p303 = scmp.ne.s32.totalorder %s289, %s290
    %p304 = scmp.eq.s32.totalorder %s23, 7
    %p305 = por %p303, %p304
    %p307 = scmp.ne.s32.totalorder %s290, %s306
    %p308 = scmp.eq.s32.totalorder %s23, 0
    %p309 = por %p307, %p308
    %s310 = ssub.s32 %s24, %s36
    %s311 = ssub.s32 %s25, %s32
    %s312 = sor.u32 %s310, %s311
    %p313 = scmp.eq.s32.totalorder %s312, 0
    %s315 = sadd.s32 %s314, 1
    %s316 = scalar_select %p313, %s314, %s315
    %p319 = pneg %p313
    %p320 = scmp.eq.s32.totalorder %s17, 7
    %p321 = por %p319, %p320
    %p322 = scmp.ne.s32.totalorder %s314, %s317
    %p323 = scmp.eq.s32.totalorder %s17, 0
    %p324 = por %p322, %p323
    %p325 = scmp.ne.s32.totalorder %s314, %s317
    %p326 = scmp.eq.s32.totalorder %s22, 7
    %p327 = por %p325, %p326
    %p328 = scmp.ne.s32.totalorder %s317, %s318
    %p329 = scmp.eq.s32.totalorder %s22, 0
    %p330 = por %p328, %p329
    %p331 = scmp.ne.s32.totalorder %s317, %s318
    %p332 = scmp.eq.s32.totalorder %s23, 7
    %p333 = por %p331, %p332
    %p335 = scmp.ne.s32.totalorder %s318, %s334
    %p336 = scmp.eq.s32.totalorder %s23, 0
    %p337 = por %p335, %p336
    %p338 = scmp.le.s32.totalorder 1, %s17
    %p339 = scmp.lt.s32.totalorder %s17, 9
    %p340 = pnand %p338, %p339
    %p341 = pneg %p340
    // Predicated region
    $region9: #{unet_out_up_pallas.1} parent=5 // pred_check
      _
    $region10: #{unet_out_up_pallas.1} parent=5 // pred_check_branch
      %343 = sbr.rel (%p340) target = $region12
    $region11: #{unet_out_up_pallas.1} parent=5 // pred_region
      %s344 = ssub.s32 %s17, 1
      // Predicated region
      $region13: #{unet_out_up_pallas.1} parent=11 // pred_check
        %p345 = pneg %p50
      $region14: #{unet_out_up_pallas.1} parent=11 // pred_check_branch
        %347 = sbr.rel (%p345) target = $region16
      $region15: #{unet_out_up_pallas.1} parent=11 // pred_region
        _
      $region16: #{unet_out_up_pallas.1} parent=11 // pred_fallthru
        _
      // Predicated region
      $region17: #{unet_out_up_pallas.1} parent=11 // pred_check
        %p348 = pneg %p71
      $region18: #{unet_out_up_pallas.1} parent=11 // pred_check_branch
        %350 = sbr.rel (%p348) target = $region20
      $region19: #{unet_out_up_pallas.1} parent=11 // pred_region
        _
      $region20: #{unet_out_up_pallas.1} parent=11 // pred_fallthru
        _
      // Predicated region
      $region21: #{unet_out_up_pallas.1} parent=11 // pred_check
        %p351 = pneg %p92
      $region22: #{unet_out_up_pallas.1} parent=11 // pred_check_branch
        %353 = sbr.rel (%p351) target = $region24
      $region23: #{unet_out_up_pallas.1} parent=11 // pred_region
        _
      $region24: #{unet_out_up_pallas.1} parent=11 // pred_fallthru
        _
      // Predicated region
      $region25: #{unet_out_up_pallas.1} parent=11 // pred_check
        %p354 = pneg %p113
      $region26: #{unet_out_up_pallas.1} parent=11 // pred_check_branch
        %356 = sbr.rel (%p354) target = $region28
      $region27: #{unet_out_up_pallas.1} parent=11 // pred_region
        _
      $region28: #{unet_out_up_pallas.1} parent=11 // pred_fallthru
        _
      // Predicated region
      $region29: #{unet_out_up_pallas.1} parent=11 // pred_check
        %p357 = pneg %p134
      $region30: #{unet_out_up_pallas.1} parent=11 // pred_check_branch
        %359 = sbr.rel (%p357) target = $region32
      $region31: #{unet_out_up_pallas.1} parent=11 // pred_region
        _
      $region32: #{unet_out_up_pallas.1} parent=11 // pred_fallthru
        _
    $region12: #{unet_out_up_pallas.1} parent=5 // pred_fallthru
      _
    %p360 = scmp.lt.s32.totalorder %s17, 8
    // Predicated region
    $region33: #{unet_out_up_pallas.1} parent=5 // pred_check
      %p361 = pneg %p360
    $region34: #{unet_out_up_pallas.1} parent=5 // pred_check_branch
      %363 = sbr.rel (%p361) target = $region36
    $region35: #{unet_out_up_pallas.1} parent=5 // pred_region
      // Predicated region
      $region37: #{unet_out_up_pallas.1} parent=35 // pred_check
        %p364 = pneg %p156
      $region38: #{unet_out_up_pallas.1} parent=35 // pred_check_branch
        %366 = sbr.rel (%p364) target = $region40
      $region39: #{unet_out_up_pallas.1} parent=35 // pred_region
        %s367 = smul.u32 2, %s25
        %p368 = scmp.lt.s32.totalorder %s24, 1
        %s369 = scalar_select %p368, %s24, 1
        %p370 = scmp.lt.s32.totalorder %s367, 7
        %s371 = scalar_select %p370, %s367, 7
        %s372 = smul.addr %s369, 8
        %s373 = sadd.s32 %s371, %s372
        %s374 = smul.addr %s373, 8
        %s375 = scalar_lea.vmem %s5, %s374
        %s376 = smul.u32 2, %s25
      $region40: #{unet_out_up_pallas.1} parent=35 // pred_fallthru
        _
      // Predicated region
      $region41: #{unet_out_up_pallas.1} parent=35 // pred_check
        %p377 = pneg %p184
      $region42: #{unet_out_up_pallas.1} parent=35 // pred_check_branch
        %379 = sbr.rel (%p377) target = $region44
      $region43: #{unet_out_up_pallas.1} parent=35 // pred_region
        %p380 = scmp.lt.s32.totalorder %s24, 1
        %s381 = scalar_select %p380, %s24, 1
        %p382 = scmp.lt.s32.totalorder %s25, 3
        %s383 = scalar_select %p382, %s25, 3
        %s384 = smul.addr %s381, 4
        %s385 = sadd.s32 %s383, %s384
        %s386 = smul.addr %s385, 8
        %s387 = scalar_lea.vmem %s6, %s386
      $region44: #{unet_out_up_pallas.1} parent=35 // pred_fallthru
        _
      // Predicated region
      $region45: #{unet_out_up_pallas.1} parent=35 // pred_check
        %p388 = pneg %p212
      $region46: #{unet_out_up_pallas.1} parent=35 // pred_check_branch
        %390 = sbr.rel (%p388) target = $region48
      $region47: #{unet_out_up_pallas.1} parent=35 // pred_region
        %p391 = scmp.lt.s32.totalorder %s24, 1
        %s392 = scalar_select %p391, %s24, 1
        %p393 = scmp.lt.s32.totalorder %s25, 3
        %s394 = scalar_select %p393, %s25, 3
        %s395 = smul.addr %s392, 4
        %s396 = sadd.s32 %s394, %s395
        %s397 = smul.addr %s396, 8
        %s398 = scalar_lea.vmem %s7, %s397
      $region48: #{unet_out_up_pallas.1} parent=35 // pred_fallthru
        _
      // Predicated region
      $region49: #{unet_out_up_pallas.1} parent=35 // pred_check
        %p399 = pneg %p240
      $region50: #{unet_out_up_pallas.1} parent=35 // pred_check_branch
        %401 = sbr.rel (%p399) target = $region52
      $region51: #{unet_out_up_pallas.1} parent=35 // pred_region
        %s402 = smul.u32 2, %s25
        %p403 = scmp.lt.s32.totalorder %s24, 1
        %s404 = scalar_select %p403, %s24, 1
        %p405 = scmp.lt.s32.totalorder %s402, 7
        %s406 = scalar_select %p405, %s402, 7
        %s407 = smul.addr %s404, 8
        %s408 = sadd.s32 %s406, %s407
        %s409 = smul.addr %s408, 4
        %s410 = scalar_lea.vmem %s8, %s409
        %s411 = smul.u32 2, %s25
      $region52: #{unet_out_up_pallas.1} parent=35 // pred_fallthru
        _
      // Predicated region
      $region53: #{unet_out_up_pallas.1} parent=35 // pred_check
        %p412 = pneg %p268
      $region54: #{unet_out_up_pallas.1} parent=35 // pred_check_branch
        %414 = sbr.rel (%p412) target = $region56
      $region55: #{unet_out_up_pallas.1} parent=35 // pred_region
        %p415 = scmp.lt.s32.totalorder %s24, 1
        %s416 = scalar_select %p415, %s24, 1
        %p417 = scmp.lt.s32.totalorder %s25, 3
        %s418 = scalar_select %p417, %s25, 3
        %s419 = smul.addr %s416, 4
        %s420 = sadd.s32 %s418, %s419
        %s421 = smul.addr %s420, 4
        %s422 = scalar_lea.vmem %s9, %s421
      $region56: #{unet_out_up_pallas.1} parent=35 // pred_fallthru
        _
      // Predicated region
      $region57: #{unet_out_up_pallas.1} parent=35 // pred_check
        %p423 = pneg %p296
      $region58: #{unet_out_up_pallas.1} parent=35 // pred_check_branch
        %425 = sbr.rel (%p423) target = $region60
      $region59: #{unet_out_up_pallas.1} parent=35 // pred_region
        %p426 = scmp.lt.s32.totalorder %s24, 1
        %s427 = scalar_select %p426, %s24, 1
        %p428 = scmp.lt.s32.totalorder %s25, 3
        %s429 = scalar_select %p428, %s25, 3
        %s430 = smul.addr %s427, 4
        %s431 = sadd.s32 %s429, %s430
        %s432 = smul.addr %s431, 4
        %s433 = scalar_lea.vmem %s10, %s432
      $region60: #{unet_out_up_pallas.1} parent=35 // pred_fallthru
        _
    $region36: #{unet_out_up_pallas.1} parent=5 // pred_fallthru
      _
    %p434 = scmp.le.s32.totalorder 1, %s17
    %p435 = scmp.lt.s32.totalorder %s17, 9
    %p436 = pnand %p434, %p435
    %p437 = pneg %p436
    // Predicated region
    $region61: #{unet_out_up_pallas.1} parent=5 // pred_check
      _
    $region62: #{unet_out_up_pallas.1} parent=5 // pred_check_branch
      %439 = sbr.rel (%p436) target = $region64
    $region63: #{unet_out_up_pallas.1} parent=5 // pred_region
      %s440 = ssub.s32 %s17, 1
      %p441 = pneg %p50
      %p442 = pneg %p47
      %p443 = pneg %p71
      %p444 = pneg %p68
      %p445 = pneg %p92
      %p446 = pneg %p89
      %p447 = pneg %p113
      %p448 = pneg %p110
      %p449 = pneg %p134
      %p450 = pneg %p131
      %s451 = smul.u32 2, %s27
      %p452 = scmp.lt.s32.totalorder %s26, 1
      %s453 = scalar_select %p452, %s26, 1
      %p454 = scmp.lt.s32.totalorder %s451, 7
      %s455 = scalar_select %p454, %s451, 7
      %s456 = smul.addr %s453, 8
      %s457 = sadd.s32 %s455, %s456
      %s458 = smul.addr %s457, 8
      %s459 = scalar_lea.vmem %s5, %s458
      %p460 = pneg %p162
      %p461 = pneg %p159
      %p462 = scmp.lt.s32.totalorder %s26, 1
      %s463 = scalar_select %p462, %s26, 1
      %p464 = scmp.lt.s32.totalorder %s27, 3
      %s465 = scalar_select %p464, %s27, 3
      %s466 = smul.addr %s463, 4
      %s467 = sadd.s32 %s465, %s466
      %s468 = smul.addr %s467, 8
      %s469 = scalar_lea.vmem %s6, %s468
      %p470 = pneg %p190
      %p471 = pneg %p187
      %p472 = scmp.lt.s32.totalorder %s26, 1
      %s473 = scalar_select %p472, %s26, 1
      %p474 = scmp.lt.s32.totalorder %s27, 3
      %s475 = scalar_select %p474, %s27, 3
      %s476 = smul.addr %s473, 4
      %s477 = sadd.s32 %s475, %s476
      %s478 = smul.addr %s477, 8
      %s479 = scalar_lea.vmem %s7, %s478
      %p480 = pneg %p218
      %p481 = pneg %p215
      %s482 = smul.u32 2, %s27
      %p483 = scmp.lt.s32.totalorder %s26, 1
      %s484 = scalar_select %p483, %s26, 1
      %p485 = scmp.lt.s32.totalorder %s482, 7
      %s486 = scalar_select %p485, %s482, 7
      %s487 = smul.addr %s484, 8
      %s488 = sadd.s32 %s486, %s487
      %s489 = smul.addr %s488, 4
      %s490 = scalar_lea.vmem %s8, %s489
      %p491 = pneg %p246
      %p492 = pneg %p243
      %p493 = scmp.lt.s32.totalorder %s26, 1
      %s494 = scalar_select %p493, %s26, 1
      %p495 = scmp.lt.s32.totalorder %s27, 3
      %s496 = scalar_select %p495, %s27, 3
      %s497 = smul.addr %s494, 4
      %s498 = sadd.s32 %s496, %s497
      %s499 = smul.addr %s498, 4
      %s500 = scalar_lea.vmem %s9, %s499
      %p501 = pneg %p274
      %p502 = pneg %p271
      %p503 = scmp.lt.s32.totalorder %s26, 1
      %s504 = scalar_select %p503, %s26, 1
      %p505 = scmp.lt.s32.totalorder %s27, 3
      %s506 = scalar_select %p505, %s27, 3
      %s507 = smul.addr %s504, 4
      %s508 = sadd.s32 %s506, %s507
      %s509 = smul.addr %s508, 4
      %s510 = scalar_lea.vmem %s10, %s509
      %p511 = pneg %p302
      %p512 = pneg %p299
      %p513 = pneg %p330
      %p514 = pneg %p327
      %s515 = smul.u32 2, %s27
      %p516 = scmp.lt.s32.totalorder %s26, 1
      %s517 = scalar_select %p516, %s26, 1
      %p518 = scmp.lt.s32.totalorder %s515, 7
      %s519 = scalar_select %p518, %s515, 7
      %s520 = smul.addr %s517, 8
      %s521 = sadd.s32 %s519, %s520
      %s522 = smul.addr %s521, 4
      %s523 = scalar_lea.vmem %s11, %s522
      %s524 = smul.u32 2, %s27
      %p525 = scmp.lt.s32.totalorder %s26, 1
      %s526 = scalar_select %p525, %s26, 1
      %p527 = scmp.lt.s32.totalorder %s524, 7
      %s528 = scalar_select %p527, %s524, 7
      %s529 = smul.addr %s526, 8
      %s530 = sadd.s32 %s528, %s529
      %s531 = smul.addr %s530, 8
      %s532 = scalar_lea.vmem %s5, %s531
      %s533 = smul.u32 2, %s27
      %p534 = scmp.lt.s32.totalorder %s26, 1
      %s535 = scalar_select %p534, %s26, 1
      %p536 = scmp.lt.s32.totalorder %s27, 3
      %s537 = scalar_select %p536, %s27, 3
      %s538 = smul.addr %s535, 4
      %s539 = sadd.s32 %s537, %s538
      %s540 = smul.addr %s539, 8
      %s541 = scalar_lea.vmem %s6, %s540
      %p542 = scmp.lt.s32.totalorder %s26, 1
      %s543 = scalar_select %p542, %s26, 1
      %p544 = scmp.lt.s32.totalorder %s27, 3
      %s545 = scalar_select %p544, %s27, 3
      %s546 = smul.addr %s543, 4
      %s547 = sadd.s32 %s545, %s546
      %s548 = smul.addr %s547, 8
      %s549 = scalar_lea.vmem %s7, %s548
      %s550 = smul.u32 2, %s27
      %p551 = scmp.lt.s32.totalorder %s26, 1
      %s552 = scalar_select %p551, %s26, 1
      %p553 = scmp.lt.s32.totalorder %s550, 7
      %s554 = scalar_select %p553, %s550, 7
      %s555 = smul.addr %s552, 8
      %s556 = sadd.s32 %s554, %s555
      %s557 = smul.addr %s556, 4
      %s558 = scalar_lea.vmem %s8, %s557
      %s559 = smul.u32 2, %s27
      %p560 = scmp.lt.s32.totalorder %s26, 1
      %s561 = scalar_select %p560, %s26, 1
      %p562 = scmp.lt.s32.totalorder %s27, 3
      %s563 = scalar_select %p562, %s27, 3
      %s564 = smul.addr %s561, 4
      %s565 = sadd.s32 %s563, %s564
      %s566 = smul.addr %s565, 4
      %s567 = scalar_lea.vmem %s9, %s566
      %p568 = scmp.lt.s32.totalorder %s26, 1
      %s569 = scalar_select %p568, %s26, 1
      %p570 = scmp.lt.s32.totalorder %s27, 3
      %s571 = scalar_select %p570, %s27, 3
      %s572 = smul.addr %s569, 4
      %s573 = sadd.s32 %s571, %s572
      %s574 = smul.addr %s573, 4
      %s575 = scalar_lea.vmem %s10, %s574
      %s576 = smul.u32 2, %s27
      %p577 = scmp.lt.s32.totalorder %s26, 1
      %s578 = scalar_select %p577, %s26, 1
      %p579 = scmp.lt.s32.totalorder %s576, 7
      %s580 = scalar_select %p579, %s576, 7
      %s581 = smul.addr %s578, 8
      %s582 = sadd.s32 %s580, %s581
      %s583 = smul.addr %s582, 4
      %s584 = scalar_lea.vmem %s11, %s583
      %s585 = smul.u32 2, %s27
      %vm586 = vcmask 5120
      %587 = vst.msk [vmem:[#allocation2] sm:$0x3f] %vm586, 0.0
      %vm588 = vcmask 538120
      %589 = vst.msk [vmem:[#allocation2 + $0x10] sm:$0x3f] %vm588, 0.0
      %v590 = vld [vmem:[%s541] sm:$0x3f]
      %592 = vrot.lane.b32.xlu0 %v590, 1
      %v593 = vpop.permute.xlu0 %592
      %vm595 = vcmask 267272
      %596 = vst.msk [vmem:[#allocation2] sm:$0x3f] %vm595, %v593
      %v597 = vld [vmem:[%s532] sm:$0x3f]
      %v598 = vld [vmem:[%s532 + $0x8] sm:$0x3f]
      %601 = vrot.lane.b32.xlu0 %v597, 33
      %v602 = vpop.permute.xlu0 %601
      %603 = vrot.lane.b32.xlu0 %v598, 33
      %v604 = vpop.permute.xlu0 %603
      %vm605 = vcmask 269312
      %v606 = vsel %vm605, %v602, %v604
      %vm610 = vcmask 1045768
      %611 = vst.msk [vmem:[#allocation2] sm:$0x3f] %vm610, %v602
      %612 = vst [vmem:[#allocation2 + $0x8] sm:$0x3f] %v606
      %vm613 = vcmask 267264
      %614 = vst.msk [vmem:[#allocation2 + $0x10] sm:$0x3f] %vm613, %v604
      %v615 = vld [vmem:[%s549] sm:$0x3f]
      %617 = vrot.lane.b32.xlu0 %v615, 33
      %v618 = vpop.permute.xlu0 %617
      %vm620 = vcmask 529672
      %621 = vst.msk [vmem:[#allocation2 + $0x10] sm:$0x3f] %vm620, %v618
      %vm622 = vcmask 3072
      %623 = vst.msk [vmem:[#allocation3] sm:$0xf] %vm622, 0.0
      %vm624 = vcmask 536072
      %625 = vst.msk [vmem:[#allocation3 + $0x8] sm:$0xf] %vm624, 0.0
      %v626 = vld [vmem:[%s567] sm:$0xf]
      %628 = vrot.lane.b32.xlu0 %v626, 1
      %v629 = vpop.permute.xlu0 %628
      %vm631 = vcmask 265224
      %632 = vst.msk [vmem:[#allocation3] sm:$0xf] %vm631, %v629
      %v633 = vld [vmem:[%s558] sm:$0xff]
      %635 = vrot.lane.b32.xlu0 %v633, 33
      %v636 = vpop.permute.xlu0 %635
      %v637 = vrot.slane %v636, 4
      %v638 = vsel %vm605, %v637, %v636
      %vm641 = vcmask 1043720
      %vm642 = vcmask 1047556
      %vm643 = vmor %vm642, %vm641
      %644 = vst.msk [vmem:[#allocation3] sm:$0xff] %vm643, %v638
      %vm645 = vcmask 265216
      %646 = vst.msk [vmem:[#allocation3 + $0x8] sm:$0xf] %vm645, %v637
      %v647 = vld [vmem:[%s575] sm:$0xf]
      %649 = vrot.lane.b32.xlu0 %v647, 33
      %v650 = vpop.permute.xlu0 %649
      %vm652 = vcmask 527624
      %653 = vst.msk [vmem:[#allocation3 + $0x8] sm:$0xf] %vm652, %v650
      %v654 = vld [vmem:[%s0] sm:$0x3]
      %v655 = vld [vmem:[%s1] sm:$0x3]
      %v656 = vld [vmem:[%s2] sm:$0xf]
      %v657 = vld [vmem:[#allocation2] sm:$0x3f]
      %v658 = vld [vmem:[#allocation2 + $0x8] sm:$0x3f]
      %v659 = vld [vmem:[%s3] sm:$0xf]
      %v660 = vld [vmem:[#allocation3] sm:$0xff]
      %v662 = vcombine.high %v660, %v660
      %vm663 = vcmask 31744
      %v665 = vsel %vm663, %v659, 0
      %vm667 = vcmask 1043456
      %v668 = vsel %vm667, %v660, 0
      %v670 = vsel %vm667, %v662, 0
      %672 = vmatprep.subr.mxu0 0.0
      %673 = vmatpush1.msra.mxu0 0.0
      %674 = vmatprep.subr.mxu0 0.0
      %675 = vmatpush1.msra.mxu0 0.0
      %676 = vmatprep.subr.mxu0 0.0
      %677 = vmatpush1.msra.mxu0 0.0
      %678 = vmatprep.subr.mxu0 0.0
      %679 = vmatpush1.msra.mxu0 0.0
      %680 = vmatprep.subr.mxu0 0.0
      %681 = vmatpush1.msra.mxu0 0.0
      %682 = vmatprep.subr.mxu0 0.0
      %683 = vmatpush1.msra.mxu0 0.0
      %684 = vmatprep.subr.mxu0 0.0
      %685 = vmatpush1.msra.mxu0 0.0
      %686 = vmatprep.subr.mxu0 0.0
      %687 = vmatpush1.msra.mxu0 0.0
      %688 = vmatprep.subr.mxu0 0.0
      %689 = vmatpush1.msra.mxu0 0.0
      %690 = vmatprep.subr.mxu0 0.0
      %691 = vmatpush1.msra.mxu0 0.0
      %692 = vmatprep.subr.mxu0 0.0
      %693 = vmatpush1.msra.mxu0 0.0
      %694 = vmatprep.subr.mxu0 0.0
      %695 = vmatpush1.msra.mxu0 0.0
      %696 = vmatprep.subr.mxu0 0.0
      %697 = vmatpush1.msra.mxu0 0.0
      %698 = vmatprep.subr.mxu0 0.0
      %699 = vmatpush1.msra.mxu0 0.0
      %700 = vmatprep.subr.mxu0 0.0
      %701 = vmatpush1.msra.mxu0 0.0
      %702 = vmatprep.subr.mxu0 %v670
      %703 = vmatpush1.msra.mxu0 %v668
      %704 = vmatprep.subr.mxu0 0.0
      %705 = vmatpush2.msra.mxu0 0.0
      %706 = vmatprep.subr.mxu0 0.0
      %707 = vmatpush2.msra.mxu0 0.0
      %708 = vmatprep.subr.mxu0 0.0
      %709 = vmatpush2.msra.mxu0 0.0
      %710 = vmatprep.subr.mxu0 0.0
      %711 = vmatpush2.msra.mxu0 0.0
      %712 = vmatprep.subr.mxu0 0.0
      %713 = vmatpush2.msra.mxu0 0.0
      %714 = vmatprep.subr.mxu0 0.0
      %715 = vmatpush2.msra.mxu0 0.0
      %716 = vmatprep.subr.mxu0 0.0
      %717 = vmatpush2.msra.mxu0 0.0
      %718 = vmatprep.subr.mxu0 0.0
      %719 = vmatpush2.msra.mxu0 0.0
      %720 = vmatprep.subr.mxu0 0.0
      %721 = vmatpush2.msra.mxu0 0.0
      %722 = vmatprep.subr.mxu0 0.0
      %723 = vmatpush2.msra.mxu0 0.0
      %724 = vmatprep.subr.mxu0 0.0
      %725 = vmatpush2.msra.mxu0 0.0
      %726 = vmatprep.subr.mxu0 0.0
      %727 = vmatpush2.msra.mxu0 0.0
      %728 = vmatprep.subr.mxu0 0.0
      %729 = vmatpush2.msra.mxu0 0.0
      %730 = vmatprep.subr.mxu0 0.0
      %731 = vmatpush2.msra.mxu0 0.0
      %732 = vmatprep.subr.mxu0 0.0
      %733 = vmatpush2.msra.mxu0 0.0
      %734 = vmatprep.subr.mxu0 0.0
      %735 = vmatpush2.msra.mxu0 0.0
      %736 = vmatprep.mubr.f32.mxu0 0.0
      %737 = vmatmul.mubr.f32.gmra.mxu0 %v665
      %v738 = vpop.f32.mrf.mxu0
      %v739 = vadd.f32 0.0, %v738
      %v740 = vpop.f32.mrf.mxu0
      %v741 = vadd.f32 0.0, %v740
      %742 = vdwg.mxu0
      %vm743 = vcmask 48128
      %v745 = vsel %vm743, %v656, 0
      %vm747 = vcmask 1045504
      %v749 = vsel %vm747, %v657, 0
      %v752 = vsel %vm747, %v658, 0
      %754 = vmatprep.subr.mxu0 0.0
      %755 = vmatpush1.msra.mxu0 0.0
      %756 = vmatprep.subr.mxu0 0.0
      %757 = vmatpush1.msra.mxu0 0.0
      %758 = vmatprep.subr.mxu0 0.0
      %759 = vmatpush1.msra.mxu0 0.0
      %760 = vmatprep.subr.mxu0 0.0
      %761 = vmatpush1.msra.mxu0 0.0
      %762 = vmatprep.subr.mxu0 0.0
      %763 = vmatpush1.msra.mxu0 0.0
      %764 = vmatprep.subr.mxu0 0.0
      %765 = vmatpush1.msra.mxu0 0.0
      %766 = vmatprep.subr.mxu0 0.0
      %767 = vmatpush1.msra.mxu0 0.0
      %768 = vmatprep.subr.mxu0 0.0
      %769 = vmatpush1.msra.mxu0 0.0
      %770 = vmatprep.subr.mxu0 0.0
      %771 = vmatpush1.msra.mxu0 0.0
      %772 = vmatprep.subr.mxu0 0.0
      %773 = vmatpush1.msra.mxu0 0.0
      %774 = vmatprep.subr.mxu0 0.0
      %775 = vmatpush1.msra.mxu0 0.0
      %776 = vmatprep.subr.mxu0 0.0
      %777 = vmatpush1.msra.mxu0 0.0
      %778 = vmatprep.subr.mxu0 0.0
      %779 = vmatpush1.msra.mxu0 0.0
      %780 = vmatprep.subr.mxu0 0.0
      %781 = vmatpush1.msra.mxu0 0.0
      %782 = vmatprep.subr.mxu0 0.0
      %783 = vmatpush1.msra.mxu0 0.0
      %784 = vmatprep.subr.mxu0 %v752
      %785 = vmatpush1.msra.mxu0 %v749
      %786 = vmatprep.subr.mxu0 0.0
      %787 = vmatpush2.msra.mxu0 0.0
      %788 = vmatprep.subr.mxu0 0.0
      %789 = vmatpush2.msra.mxu0 0.0
      %790 = vmatprep.subr.mxu0 0.0
      %791 = vmatpush2.msra.mxu0 0.0
      %792 = vmatprep.subr.mxu0 0.0
      %793 = vmatpush2.msra.mxu0 0.0
      %794 = vmatprep.subr.mxu0 0.0
      %795 = vmatpush2.msra.mxu0 0.0
      %796 = vmatprep.subr.mxu0 0.0
      %797 = vmatpush2.msra.mxu0 0.0
      %798 = vmatprep.subr.mxu0 0.0
      %799 = vmatpush2.msra.mxu0 0.0
      %800 = vmatprep.subr.mxu0 0.0
      %801 = vmatpush2.msra.mxu0 0.0
      %802 = vmatprep.subr.mxu0 0.0
      %803 = vmatpush2.msra.mxu0 0.0
      %804 = vmatprep.subr.mxu0 0.0
      %805 = vmatpush2.msra.mxu0 0.0
      %806 = vmatprep.subr.mxu0 0.0
      %807 = vmatpush2.msra.mxu0 0.0
      %808 = vmatprep.subr.mxu0 0.0
      %809 = vmatpush2.msra.mxu0 0.0
      %810 = vmatprep.subr.mxu0 0.0
      %811 = vmatpush2.msra.mxu0 0.0
      %812 = vmatprep.subr.mxu0 0.0
      %813 = vmatpush2.msra.mxu0 0.0
      %814 = vmatprep.subr.mxu0 0.0
      %815 = vmatpush2.msra.mxu0 0.0
      %816 = vmatprep.subr.mxu0 0.0
      %817 = vmatpush2.msra.mxu0 0.0
      %818 = vmatprep.mubr.f32.mxu0 0.0
      %819 = vmatmul.mubr.f32.gmra.mxu0 %v745
      %v820 = vpop.f32.mrf.mxu0
      %v821 = vadd.f32 %v739, %v820
      %v822 = vpop.f32.mrf.mxu0
      %v823 = vadd.f32 %v741, %v822
      %824 = vdwg.mxu0
      %v826 = vlaneseq
      %v827 = vshrl.u32 %v826, 7
      %v828 = vsub.s32 0, %v827
      %v829 = vrot.slane %v654, %v828
      %v830 = vlaneseq
      %v831 = vshrl.u32 %v830, 7
      %v832 = vsub.s32 1, %v831
      %v833 = vrot.slane %v654, %v832
      %v836 = vmul.f32 %v821, %v829
      %v837 = vmul.f32 %v823, %v833
      %v838 = vadd.f32 %v836, 0.0
      %v839 = vadd.f32 %v837, 0.0
      %s840 = scalar_lea.vmem %s2, 4
      %v841 = vld [vmem:[%s840] sm:$0xf]
      %v842 = vld [vmem:[#allocation2] sm:$0x3f]
      %v843 = vld [vmem:[#allocation2 + $0x8] sm:$0x3f]
      %v844 = vld [vmem:[#allocation2 + $0x10] sm:$0x3f]
      %s845 = scalar_lea.vmem %s3, 4
      %v846 = vld [vmem:[%s845] sm:$0xf]
      %v847 = vld [vmem:[#allocation3] sm:$0xff]
      %v848 = vld [vmem:[#allocation3 + $0x8] sm:$0xf]
      %v851 = vcombine.high %v847, %v847
      %852 = vrot.lane.b32.xlu0 %v847, 127
      %v853 = vpop.permute.xlu0 %852
      %854 = vrot.lane.b32.xlu0 %v851, 127
      %v855 = vpop.permute.xlu0 %854
      %856 = vrot.lane.b32.xlu0 %v848, 127
      %v857 = vpop.permute.xlu0 %856
      %vm858 = vcmask 1039360
      %v859 = vsel %vm858, %v853, %v855
      %v860 = vsel %vm858, %v855, %v857
      %v862 = vsel %vm663, %v846, 0
      %v864 = vsel %vm667, %v859, 0
      %v866 = vsel %vm667, %v860, 0
      %868 = vmatprep.subr.mxu0 0.0
      %869 = vmatpush1.msra.mxu0 0.0
      %870 = vmatprep.subr.mxu0 0.0
      %871 = vmatpush1.msra.mxu0 0.0
      %872 = vmatprep.subr.mxu0 0.0
      %873 = vmatpush1.msra.mxu0 0.0
      %874 = vmatprep.subr.mxu0 0.0
      %875 = vmatpush1.msra.mxu0 0.0
      %876 = vmatprep.subr.mxu0 0.0
      %877 = vmatpush1.msra.mxu0 0.0
      %878 = vmatprep.subr.mxu0 0.0
      %879 = vmatpush1.msra.mxu0 0.0
      %880 = vmatprep.subr.mxu0 0.0
      %881 = vmatpush1.msra.mxu0 0.0
      %882 = vmatprep.subr.mxu0 0.0
      %883 = vmatpush1.msra.mxu0 0.0
      %884 = vmatprep.subr.mxu0 0.0
      %885 = vmatpush1.msra.mxu0 0.0
      %886 = vmatprep.subr.mxu0 0.0
      %887 = vmatpush1.msra.mxu0 0.0
      %888 = vmatprep.subr.mxu0 0.0
      %889 = vmatpush1.msra.mxu0 0.0
      %890 = vmatprep.subr.mxu0 0.0
      %891 = vmatpush1.msra.mxu0 0.0
      %892 = vmatprep.subr.mxu0 0.0
      %893 = vmatpush1.msra.mxu0 0.0
      %894 = vmatprep.subr.mxu0 0.0
      %895 = vmatpush1.msra.mxu0 0.0
      %896 = vmatprep.subr.mxu0 0.0
      %897 = vmatpush1.msra.mxu0 0.0
      %898 = vmatprep.subr.mxu0 %v866
      %899 = vmatpush1.msra.mxu0 %v864
      %900 = vmatprep.subr.mxu0 0.0
      %901 = vmatpush2.msra.mxu0 0.0
      %902 = vmatprep.subr.mxu0 0.0
      %903 = vmatpush2.msra.mxu0 0.0
      %904 = vmatprep.subr.mxu0 0.0
      %905 = vmatpush2.msra.mxu0 0.0
      %906 = vmatprep.subr.mxu0 0.0
      %907 = vmatpush2.msra.mxu0 0.0
      %908 = vmatprep.subr.mxu0 0.0
      %909 = vmatpush2.msra.mxu0 0.0
      %910 = vmatprep.subr.mxu0 0.0
      %911 = vmatpush2.msra.mxu0 0.0
      %912 = vmatprep.subr.mxu0 0.0
      %913 = vmatpush2.msra.mxu0 0.0
      %914 = vmatprep.subr.mxu0 0.0
      %915 = vmatpush2.msra.mxu0 0.0
      %916 = vmatprep.subr.mxu0 0.0
      %917 = vmatpush2.msra.mxu0 0.0
      %918 = vmatprep.subr.mxu0 0.0
      %919 = vmatpush2.msra.mxu0 0.0
      %920 = vmatprep.subr.mxu0 0.0
      %921 = vmatpush2.msra.mxu0 0.0
      %922 = vmatprep.subr.mxu0 0.0
      %923 = vmatpush2.msra.mxu0 0.0
      %924 = vmatprep.subr.mxu0 0.0
      %925 = vmatpush2.msra.mxu0 0.0
      %926 = vmatprep.subr.mxu0 0.0
      %927 = vmatpush2.msra.mxu0 0.0
      %928 = vmatprep.subr.mxu0 0.0
      %929 = vmatpush2.msra.mxu0 0.0
      %930 = vmatprep.subr.mxu0 0.0
      %931 = vmatpush2.msra.mxu0 0.0
      %932 = vmatprep.mubr.f32.mxu0 0.0
      %933 = vmatmul.mubr.f32.gmra.mxu0 %v862
      %v934 = vpop.f32.mrf.mxu0
      %v935 = vadd.f32 0.0, %v934
      %v936 = vpop.f32.mrf.mxu0
      %v937 = vadd.f32 0.0, %v936
      %938 = vdwg.mxu0
      %942 = vrot.lane.b32.xlu0 %v842, 127
      %v943 = vpop.permute.xlu0 %942
      %944 = vrot.lane.b32.xlu0 %v843, 127
      %v945 = vpop.permute.xlu0 %944
      %946 = vrot.lane.b32.xlu0 %v844, 127
      %v947 = vpop.permute.xlu0 %946
      %v948 = vsel %vm858, %v943, %v945
      %v949 = vsel %vm858, %v945, %v947
      %v951 = vsel %vm743, %v841, 0
      %v953 = vsel %vm747, %v948, 0
      %v955 = vsel %vm747, %v949, 0
      %957 = vmatprep.subr.mxu0 0.0
      %958 = vmatpush1.msra.mxu0 0.0
      %959 = vmatprep.subr.mxu0 0.0
      %960 = vmatpush1.msra.mxu0 0.0
      %961 = vmatprep.subr.mxu0 0.0
      %962 = vmatpush1.msra.mxu0 0.0
      %963 = vmatprep.subr.mxu0 0.0
      %964 = vmatpush1.msra.mxu0 0.0
      %965 = vmatprep.subr.mxu0 0.0
      %966 = vmatpush1.msra.mxu0 0.0
      %967 = vmatprep.subr.mxu0 0.0
      %968 = vmatpush1.msra.mxu0 0.0
      %969 = vmatprep.subr.mxu0 0.0
      %970 = vmatpush1.msra.mxu0 0.0
      %971 = vmatprep.subr.mxu0 0.0
      %972 = vmatpush1.msra.mxu0 0.0
      %973 = vmatprep.subr.mxu0 0.0
      %974 = vmatpush1.msra.mxu0 0.0
      %975 = vmatprep.subr.mxu0 0.0
      %976 = vmatpush1.msra.mxu0 0.0
      %977 = vmatprep.subr.mxu0 0.0
      %978 = vmatpush1.msra.mxu0 0.0
      %979 = vmatprep.subr.mxu0 0.0
      %980 = vmatpush1.msra.mxu0 0.0
      %981 = vmatprep.subr.mxu0 0.0
      %982 = vmatpush1.msra.mxu0 0.0
      %983 = vmatprep.subr.mxu0 0.0
      %984 = vmatpush1.msra.mxu0 0.0
      %985 = vmatprep.subr.mxu0 0.0
      %986 = vmatpush1.msra.mxu0 0.0
      %987 = vmatprep.subr.mxu0 %v955
      %988 = vmatpush1.msra.mxu0 %v953
      %989 = vmatprep.subr.mxu0 0.0
      %990 = vmatpush2.msra.mxu0 0.0
      %991 = vmatprep.subr.mxu0 0.0
      %992 = vmatpush2.msra.mxu0 0.0
      %993 = vmatprep.subr.mxu0 0.0
      %994 = vmatpush2.msra.mxu0 0.0
      %995 = vmatprep.subr.mxu0 0.0
      %996 = vmatpush2.msra.mxu0 0.0
      %997 = vmatprep.subr.mxu0 0.0
      %998 = vmatpush2.msra.mxu0 0.0
      %999 = vmatprep.subr.mxu0 0.0
      %1000 = vmatpush2.msra.mxu0 0.0
      %1001 = vmatprep.subr.mxu0 0.0
      %1002 = vmatpush2.msra.mxu0 0.0
      %1003 = vmatprep.subr.mxu0 0.0
      %1004 = vmatpush2.msra.mxu0 0.0
      %1005 = vmatprep.subr.mxu0 0.0
      %1006 = vmatpush2.msra.mxu0 0.0
      %1007 = vmatprep.subr.mxu0 0.0
      %1008 = vmatpush2.msra.mxu0 0.0
      %1009 = vmatprep.subr.mxu0 0.0
      %1010 = vmatpush2.msra.mxu0 0.0
      %1011 = vmatprep.subr.mxu0 0.0
      %1012 = vmatpush2.msra.mxu0 0.0
      %1013 = vmatprep.subr.mxu0 0.0
      %1014 = vmatpush2.msra.mxu0 0.0
      %1015 = vmatprep.subr.mxu0 0.0
      %1016 = vmatpush2.msra.mxu0 0.0
      %1017 = vmatprep.subr.mxu0 0.0
      %1018 = vmatpush2.msra.mxu0 0.0
      %1019 = vmatprep.subr.mxu0 0.0
      %1020 = vmatpush2.msra.mxu0 0.0
      %1021 = vmatprep.mubr.f32.mxu0 0.0
      %1022 = vmatmul.mubr.f32.gmra.mxu0 %v951
      %v1023 = vpop.f32.mrf.mxu0
      %v1024 = vadd.f32 %v935, %v1023
      %v1025 = vpop.f32.mrf.mxu0
      %v1026 = vadd.f32 %v937, %v1025
      %1027 = vdwg.mxu0
      %v1028 = vadd.f32 %v838, %v1024
      %v1029 = vadd.f32 %v839, %v1026
      %s1030 = scalar_lea.vmem %s2, 8
      %v1031 = vld [vmem:[%s1030] sm:$0xf]
      %v1032 = vld [vmem:[#allocation2] sm:$0x3f]
      %v1033 = vld [vmem:[#allocation2 + $0x8] sm:$0x3f]
      %v1034 = vld [vmem:[#allocation2 + $0x10] sm:$0x3f]
      %s1035 = scalar_lea.vmem %s3, 8
      %v1036 = vld [vmem:[%s1035] sm:$0xf]
      %v1037 = vld [vmem:[#allocation3] sm:$0xff]
      %v1038 = vld [vmem:[#allocation3 + $0x8] sm:$0xf]
      %v1041 = vcombine.high %v1037, %v1037
      %1042 = vrot.lane.b32.xlu0 %v1037, 126
      %v1043 = vpop.permute.xlu0 %1042
      %1044 = vrot.lane.b32.xlu0 %v1041, 126
      %v1045 = vpop.permute.xlu0 %1044
      %1046 = vrot.lane.b32.xlu0 %v1038, 126
      %v1047 = vpop.permute.xlu0 %1046
      %vm1048 = vcmask 1031168
      %v1049 = vsel %vm1048, %v1043, %v1045
      %v1050 = vsel %vm1048, %v1045, %v1047
      %v1052 = vsel %vm663, %v1036, 0
      %v1054 = vsel %vm667, %v1049, 0
      %v1056 = vsel %vm667, %v1050, 0
      %1058 = vmatprep.subr.mxu0 0.0
      %1059 = vmatpush1.msra.mxu0 0.0
      %1060 = vmatprep.subr.mxu0 0.0
      %1061 = vmatpush1.msra.mxu0 0.0
      %1062 = vmatprep.subr.mxu0 0.0
      %1063 = vmatpush1.msra.mxu0 0.0
      %1064 = vmatprep.subr.mxu0 0.0
      %1065 = vmatpush1.msra.mxu0 0.0
      %1066 = vmatprep.subr.mxu0 0.0
      %1067 = vmatpush1.msra.mxu0 0.0
      %1068 = vmatprep.subr.mxu0 0.0
      %1069 = vmatpush1.msra.mxu0 0.0
      %1070 = vmatprep.subr.mxu0 0.0
      %1071 = vmatpush1.msra.mxu0 0.0
      %1072 = vmatprep.subr.mxu0 0.0
      %1073 = vmatpush1.msra.mxu0 0.0
      %1074 = vmatprep.subr.mxu0 0.0
      %1075 = vmatpush1.msra.mxu0 0.0
      %1076 = vmatprep.subr.mxu0 0.0
      %1077 = vmatpush1.msra.mxu0 0.0
      %1078 = vmatprep.subr.mxu0 0.0
      %1079 = vmatpush1.msra.mxu0 0.0
      %1080 = vmatprep.subr.mxu0 0.0
      %1081 = vmatpush1.msra.mxu0 0.0
      %1082 = vmatprep.subr.mxu0 0.0
      %1083 = vmatpush1.msra.mxu0 0.0
      %1084 = vmatprep.subr.mxu0 0.0
      %1085 = vmatpush1.msra.mxu0 0.0
      %1086 = vmatprep.subr.mxu0 0.0
      %1087 = vmatpush1.msra.mxu0 0.0
      %1088 = vmatprep.subr.mxu0 %v1056
      %1089 = vmatpush1.msra.mxu0 %v1054
      %1090 = vmatprep.subr.mxu0 0.0
      %1091 = vmatpush2.msra.mxu0 0.0
      %1092 = vmatprep.subr.mxu0 0.0
      %1093 = vmatpush2.msra.mxu0 0.0
      %1094 = vmatprep.subr.mxu0 0.0
      %1095 = vmatpush2.msra.mxu0 0.0
      %1096 = vmatprep.subr.mxu0 0.0
      %1097 = vmatpush2.msra.mxu0 0.0
      %1098 = vmatprep.subr.mxu0 0.0
      %1099 = vmatpush2.msra.mxu0 0.0
      %1100 = vmatprep.subr.mxu0 0.0
      %1101 = vmatpush2.msra.mxu0 0.0
      %1102 = vmatprep.subr.mxu0 0.0
      %1103 = vmatpush2.msra.mxu0 0.0
      %1104 = vmatprep.subr.mxu0 0.0
      %1105 = vmatpush2.msra.mxu0 0.0
      %1106 = vmatprep.subr.mxu0 0.0
      %1107 = vmatpush2.msra.mxu0 0.0
      %1108 = vmatprep.subr.mxu0 0.0
      %1109 = vmatpush2.msra.mxu0 0.0
      %1110 = vmatprep.subr.mxu0 0.0
      %1111 = vmatpush2.msra.mxu0 0.0
      %1112 = vmatprep.subr.mxu0 0.0
      %1113 = vmatpush2.msra.mxu0 0.0
      %1114 = vmatprep.subr.mxu0 0.0
      %1115 = vmatpush2.msra.mxu0 0.0
      %1116 = vmatprep.subr.mxu0 0.0
      %1117 = vmatpush2.msra.mxu0 0.0
      %1118 = vmatprep.subr.mxu0 0.0
      %1119 = vmatpush2.msra.mxu0 0.0
      %1120 = vmatprep.subr.mxu0 0.0
      %1121 = vmatpush2.msra.mxu0 0.0
      %1122 = vmatprep.mubr.f32.mxu0 0.0
      %1123 = vmatmul.mubr.f32.gmra.mxu0 %v1052
      %v1124 = vpop.f32.mrf.mxu0
      %v1125 = vadd.f32 0.0, %v1124
      %v1126 = vpop.f32.mrf.mxu0
      %v1127 = vadd.f32 0.0, %v1126
      %1128 = vdwg.mxu0
      %1132 = vrot.lane.b32.xlu0 %v1032, 126
      %v1133 = vpop.permute.xlu0 %1132
      %1134 = vrot.lane.b32.xlu0 %v1033, 126
      %v1135 = vpop.permute.xlu0 %1134
      %1136 = vrot.lane.b32.xlu0 %v1034, 126
      %v1137 = vpop.permute.xlu0 %1136
      %v1138 = vsel %vm1048, %v1133, %v1135
      %v1139 = vsel %vm1048, %v1135, %v1137
      %v1141 = vsel %vm743, %v1031, 0
      %v1143 = vsel %vm747, %v1138, 0
      %v1145 = vsel %vm747, %v1139, 0
      %1147 = vmatprep.subr.mxu0 0.0
      %1148 = vmatpush1.msra.mxu0 0.0
      %1149 = vmatprep.subr.mxu0 0.0
      %1150 = vmatpush1.msra.mxu0 0.0
      %1151 = vmatprep.subr.mxu0 0.0
      %1152 = vmatpush1.msra.mxu0 0.0
      %1153 = vmatprep.subr.mxu0 0.0
      %1154 = vmatpush1.msra.mxu0 0.0
      %1155 = vmatprep.subr.mxu0 0.0
      %1156 = vmatpush1.msra.mxu0 0.0
      %1157 = vmatprep.subr.mxu0 0.0
      %1158 = vmatpush1.msra.mxu0 0.0
      %1159 = vmatprep.subr.mxu0 0.0
      %1160 = vmatpush1.msra.mxu0 0.0
      %1161 = vmatprep.subr.mxu0 0.0
      %1162 = vmatpush1.msra.mxu0 0.0
      %1163 = vmatprep.subr.mxu0 0.0
      %1164 = vmatpush1.msra.mxu0 0.0
      %1165 = vmatprep.subr.mxu0 0.0
      %1166 = vmatpush1.msra.mxu0 0.0
      %1167 = vmatprep.subr.mxu0 0.0
      %1168 = vmatpush1.msra.mxu0 0.0
      %1169 = vmatprep.subr.mxu0 0.0
      %1170 = vmatpush1.msra.mxu0 0.0
      %1171 = vmatprep.subr.mxu0 0.0
      %1172 = vmatpush1.msra.mxu0 0.0
      %1173 = vmatprep.subr.mxu0 0.0
      %1174 = vmatpush1.msra.mxu0 0.0
      %1175 = vmatprep.subr.mxu0 0.0
      %1176 = vmatpush1.msra.mxu0 0.0
      %1177 = vmatprep.subr.mxu0 %v1145
      %1178 = vmatpush1.msra.mxu0 %v1143
      %1179 = vmatprep.subr.mxu0 0.0
      %1180 = vmatpush2.msra.mxu0 0.0
      %1181 = vmatprep.subr.mxu0 0.0
      %1182 = vmatpush2.msra.mxu0 0.0
      %1183 = vmatprep.subr.mxu0 0.0
      %1184 = vmatpush2.msra.mxu0 0.0
      %1185 = vmatprep.subr.mxu0 0.0
      %1186 = vmatpush2.msra.mxu0 0.0
      %1187 = vmatprep.subr.mxu0 0.0
      %1188 = vmatpush2.msra.mxu0 0.0
      %1189 = vmatprep.subr.mxu0 0.0
      %1190 = vmatpush2.msra.mxu0 0.0
      %1191 = vmatprep.subr.mxu0 0.0
      %1192 = vmatpush2.msra.mxu0 0.0
      %1193 = vmatprep.subr.mxu0 0.0
      %1194 = vmatpush2.msra.mxu0 0.0
      %1195 = vmatprep.subr.mxu0 0.0
      %1196 = vmatpush2.msra.mxu0 0.0
      %1197 = vmatprep.subr.mxu0 0.0
      %1198 = vmatpush2.msra.mxu0 0.0
      %1199 = vmatprep.subr.mxu0 0.0
      %1200 = vmatpush2.msra.mxu0 0.0
      %1201 = vmatprep.subr.mxu0 0.0
      %1202 = vmatpush2.msra.mxu0 0.0
      %1203 = vmatprep.subr.mxu0 0.0
      %1204 = vmatpush2.msra.mxu0 0.0
      %1205 = vmatprep.subr.mxu0 0.0
      %1206 = vmatpush2.msra.mxu0 0.0
      %1207 = vmatprep.subr.mxu0 0.0
      %1208 = vmatpush2.msra.mxu0 0.0
      %1209 = vmatprep.subr.mxu0 0.0
      %1210 = vmatpush2.msra.mxu0 0.0
      %1211 = vmatprep.mubr.f32.mxu0 0.0
      %1212 = vmatmul.mubr.f32.gmra.mxu0 %v1141
      %v1213 = vpop.f32.mrf.mxu0
      %v1214 = vadd.f32 %v1125, %v1213
      %v1215 = vpop.f32.mrf.mxu0
      %v1216 = vadd.f32 %v1127, %v1215
      %1217 = vdwg.mxu0
      %v1219 = vlaneseq
      %v1220 = vshrl.u32 %v1219, 7
      %v1221 = vsub.s32 0, %v1220
      %v1222 = vrot.slane %v655, %v1221
      %v1223 = vlaneseq
      %v1224 = vshrl.u32 %v1223, 7
      %v1225 = vsub.s32 1, %v1224
      %v1226 = vrot.slane %v655, %v1225
      %v1229 = vmul.f32 %v1214, %v1222
      %v1230 = vmul.f32 %v1216, %v1226
      %v1231 = vadd.f32 %v1028, %v1229
      %v1232 = vadd.f32 %v1029, %v1230
      %s1233 = scalar_lea.vmem %s2, 12
      %v1234 = vld [vmem:[%s1233] sm:$0xf]
      %v1235 = vld [vmem:[#allocation2] sm:$0x3f]
      %v1236 = vld [vmem:[#allocation2 + $0x8] sm:$0x3f]
      %v1237 = vld [vmem:[#allocation2 + $0x10] sm:$0x3f]
      %s1238 = scalar_lea.vmem %s3, 12
      %v1239 = vld [vmem:[%s1238] sm:$0xf]
      %v1240 = vld [vmem:[#allocation3] sm:$0xff]
      %v1241 = vld [vmem:[#allocation3 + $0x8] sm:$0xf]
      %v1244 = vcombine.high %v1240, %v1240
      %1245 = vrot.lane.b32.xlu0 %v1240, 96
      %v1246 = vpop.permute.xlu0 %1245
      %1247 = vrot.lane.b32.xlu0 %v1244, 96
      %v1248 = vpop.permute.xlu0 %1247
      %1249 = vrot.lane.b32.xlu0 %v1241, 96
      %v1250 = vpop.permute.xlu0 %1249
      %vm1251 = vcmask 785408
      %v1252 = vsel %vm1251, %v1246, %v1248
      %v1253 = vsel %vm1251, %v1248, %v1250
      %v1255 = vsel %vm663, %v1239, 0
      %v1257 = vsel %vm667, %v1252, 0
      %v1259 = vsel %vm667, %v1253, 0
      %1261 = vmatprep.subr.mxu0 0.0
      %1262 = vmatpush1.msra.mxu0 0.0
      %1263 = vmatprep.subr.mxu0 0.0
      %1264 = vmatpush1.msra.mxu0 0.0
      %1265 = vmatprep.subr.mxu0 0.0
      %1266 = vmatpush1.msra.mxu0 0.0
      %1267 = vmatprep.subr.mxu0 0.0
      %1268 = vmatpush1.msra.mxu0 0.0
      %1269 = vmatprep.subr.mxu0 0.0
      %1270 = vmatpush1.msra.mxu0 0.0
      %1271 = vmatprep.subr.mxu0 0.0
      %1272 = vmatpush1.msra.mxu0 0.0
      %1273 = vmatprep.subr.mxu0 0.0
      %1274 = vmatpush1.msra.mxu0 0.0
      %1275 = vmatprep.subr.mxu0 0.0
      %1276 = vmatpush1.msra.mxu0 0.0
      %1277 = vmatprep.subr.mxu0 0.0
      %1278 = vmatpush1.msra.mxu0 0.0
      %1279 = vmatprep.subr.mxu0 0.0
      %1280 = vmatpush1.msra.mxu0 0.0
      %1281 = vmatprep.subr.mxu0 0.0
      %1282 = vmatpush1.msra.mxu0 0.0
      %1283 = vmatprep.subr.mxu0 0.0
      %1284 = vmatpush1.msra.mxu0 0.0
      %1285 = vmatprep.subr.mxu0 0.0
      %1286 = vmatpush1.msra.mxu0 0.0
      %1287 = vmatprep.subr.mxu0 0.0
      %1288 = vmatpush1.msra.mxu0 0.0
      %1289 = vmatprep.subr.mxu0 0.0
      %1290 = vmatpush1.msra.mxu0 0.0
      %1291 = vmatprep.subr.mxu0 %v1259
      %1292 = vmatpush1.msra.mxu0 %v1257
      %1293 = vmatprep.subr.mxu0 0.0
      %1294 = vmatpush2.msra.mxu0 0.0
      %1295 = vmatprep.subr.mxu0 0.0
      %1296 = vmatpush2.msra.mxu0 0.0
      %1297 = vmatprep.subr.mxu0 0.0
      %1298 = vmatpush2.msra.mxu0 0.0
      %1299 = vmatprep.subr.mxu0 0.0
      %1300 = vmatpush2.msra.mxu0 0.0
      %1301 = vmatprep.subr.mxu0 0.0
      %1302 = vmatpush2.msra.mxu0 0.0
      %1303 = vmatprep.subr.mxu0 0.0
      %1304 = vmatpush2.msra.mxu0 0.0
      %1305 = vmatprep.subr.mxu0 0.0
      %1306 = vmatpush2.msra.mxu0 0.0
      %1307 = vmatprep.subr.mxu0 0.0
      %1308 = vmatpush2.msra.mxu0 0.0
      %1309 = vmatprep.subr.mxu0 0.0
      %1310 = vmatpush2.msra.mxu0 0.0
      %1311 = vmatprep.subr.mxu0 0.0
      %1312 = vmatpush2.msra.mxu0 0.0
      %1313 = vmatprep.subr.mxu0 0.0
      %1314 = vmatpush2.msra.mxu0 0.0
      %1315 = vmatprep.subr.mxu0 0.0
      %1316 = vmatpush2.msra.mxu0 0.0
      %1317 = vmatprep.subr.mxu0 0.0
      %1318 = vmatpush2.msra.mxu0 0.0
      %1319 = vmatprep.subr.mxu0 0.0
      %1320 = vmatpush2.msra.mxu0 0.0
      %1321 = vmatprep.subr.mxu0 0.0
      %1322 = vmatpush2.msra.mxu0 0.0
      %1323 = vmatprep.subr.mxu0 0.0
      %1324 = vmatpush2.msra.mxu0 0.0
      %1325 = vmatprep.mubr.f32.mxu0 0.0
      %1326 = vmatmul.mubr.f32.gmra.mxu0 %v1255
      %v1327 = vpop.f32.mrf.mxu0
      %v1328 = vadd.f32 0.0, %v1327
      %v1329 = vpop.f32.mrf.mxu0
      %v1330 = vadd.f32 0.0, %v1329
      %1331 = vdwg.mxu0
      %1335 = vrot.lane.b32.xlu0 %v1235, 96
      %v1336 = vpop.permute.xlu0 %1335
      %1337 = vrot.lane.b32.xlu0 %v1236, 96
      %v1338 = vpop.permute.xlu0 %1337
      %1339 = vrot.lane.b32.xlu0 %v1237, 96
      %v1340 = vpop.permute.xlu0 %1339
      %v1341 = vsel %vm1251, %v1336, %v1338
      %v1342 = vsel %vm1251, %v1338, %v1340
      %v1344 = vsel %vm743, %v1234, 0
      %v1346 = vsel %vm747, %v1341, 0
      %v1348 = vsel %vm747, %v1342, 0
      %1350 = vmatprep.subr.mxu0 0.0
      %1351 = vmatpush1.msra.mxu0 0.0
      %1352 = vmatprep.subr.mxu0 0.0
      %1353 = vmatpush1.msra.mxu0 0.0
      %1354 = vmatprep.subr.mxu0 0.0
      %1355 = vmatpush1.msra.mxu0 0.0
      %1356 = vmatprep.subr.mxu0 0.0
      %1357 = vmatpush1.msra.mxu0 0.0
      %1358 = vmatprep.subr.mxu0 0.0
      %1359 = vmatpush1.msra.mxu0 0.0
      %1360 = vmatprep.subr.mxu0 0.0
      %1361 = vmatpush1.msra.mxu0 0.0
      %1362 = vmatprep.subr.mxu0 0.0
      %1363 = vmatpush1.msra.mxu0 0.0
      %1364 = vmatprep.subr.mxu0 0.0
      %1365 = vmatpush1.msra.mxu0 0.0
      %1366 = vmatprep.subr.mxu0 0.0
      %1367 = vmatpush1.msra.mxu0 0.0
      %1368 = vmatprep.subr.mxu0 0.0
      %1369 = vmatpush1.msra.mxu0 0.0
      %1370 = vmatprep.subr.mxu0 0.0
      %1371 = vmatpush1.msra.mxu0 0.0
      %1372 = vmatprep.subr.mxu0 0.0
      %1373 = vmatpush1.msra.mxu0 0.0
      %1374 = vmatprep.subr.mxu0 0.0
      %1375 = vmatpush1.msra.mxu0 0.0
      %1376 = vmatprep.subr.mxu0 0.0
      %1377 = vmatpush1.msra.mxu0 0.0
      %1378 = vmatprep.subr.mxu0 0.0
      %1379 = vmatpush1.msra.mxu0 0.0
      %1380 = vmatprep.subr.mxu0 %v1348
      %1381 = vmatpush1.msra.mxu0 %v1346
      %1382 = vmatprep.subr.mxu0 0.0
      %1383 = vmatpush2.msra.mxu0 0.0
      %1384 = vmatprep.subr.mxu0 0.0
      %1385 = vmatpush2.msra.mxu0 0.0
      %1386 = vmatprep.subr.mxu0 0.0
      %1387 = vmatpush2.msra.mxu0 0.0
      %1388 = vmatprep.subr.mxu0 0.0
      %1389 = vmatpush2.msra.mxu0 0.0
      %1390 = vmatprep.subr.mxu0 0.0
      %1391 = vmatpush2.msra.mxu0 0.0
      %1392 = vmatprep.subr.mxu0 0.0
      %1393 = vmatpush2.msra.mxu0 0.0
      %1394 = vmatprep.subr.mxu0 0.0
      %1395 = vmatpush2.msra.mxu0 0.0
      %1396 = vmatprep.subr.mxu0 0.0
      %1397 = vmatpush2.msra.mxu0 0.0
      %1398 = vmatprep.subr.mxu0 0.0
      %1399 = vmatpush2.msra.mxu0 0.0
      %1400 = vmatprep.subr.mxu0 0.0
      %1401 = vmatpush2.msra.mxu0 0.0
      %1402 = vmatprep.subr.mxu0 0.0
      %1403 = vmatpush2.msra.mxu0 0.0
      %1404 = vmatprep.subr.mxu0 0.0
      %1405 = vmatpush2.msra.mxu0 0.0
      %1406 = vmatprep.subr.mxu0 0.0
      %1407 = vmatpush2.msra.mxu0 0.0
      %1408 = vmatprep.subr.mxu0 0.0
      %1409 = vmatpush2.msra.mxu0 0.0
      %1410 = vmatprep.subr.mxu0 0.0
      %1411 = vmatpush2.msra.mxu0 0.0
      %1412 = vmatprep.subr.mxu0 0.0
      %1413 = vmatpush2.msra.mxu0 0.0
      %1414 = vmatprep.mubr.f32.mxu0 0.0
      %1415 = vmatmul.mubr.f32.gmra.mxu0 %v1344
      %v1416 = vpop.f32.mrf.mxu0
      %v1417 = vadd.f32 %v1328, %v1416
      %v1418 = vpop.f32.mrf.mxu0
      %v1419 = vadd.f32 %v1330, %v1418
      %1420 = vdwg.mxu0
      %v1421 = vmul.f32 %v1417, %v829
      %v1422 = vmul.f32 %v1419, %v833
      %v1423 = vadd.f32 %v1231, %v1421
      %v1424 = vadd.f32 %v1232, %v1422
      %s1425 = scalar_lea.vmem %s2, 16
      %v1426 = vld [vmem:[%s1425] sm:$0xf]
      %v1427 = vld [vmem:[#allocation2] sm:$0x3f]
      %v1428 = vld [vmem:[#allocation2 + $0x8] sm:$0x3f]
      %v1429 = vld [vmem:[#allocation2 + $0x10] sm:$0x3f]
      %s1430 = scalar_lea.vmem %s3, 16
      %v1431 = vld [vmem:[%s1430] sm:$0xf]
      %v1432 = vld [vmem:[#allocation3] sm:$0xff]
      %v1433 = vld [vmem:[#allocation3 + $0x8] sm:$0xf]
      %v1436 = vcombine.high %v1432, %v1432
      %1437 = vrot.lane.b32.xlu0 %v1432, 95
      %v1438 = vpop.permute.xlu0 %1437
      %1439 = vrot.lane.b32.xlu0 %v1436, 95
      %v1440 = vpop.permute.xlu0 %1439
      %1441 = vrot.lane.b32.xlu0 %v1433, 95
      %v1442 = vpop.permute.xlu0 %1441
      %vm1443 = vcmask 777216
      %v1444 = vsel %vm1443, %v1438, %v1440
      %v1445 = vsel %vm1443, %v1440, %v1442
      %v1447 = vsel %vm663, %v1431, 0
      %v1449 = vsel %vm667, %v1444, 0
      %v1451 = vsel %vm667, %v1445, 0
      %1453 = vmatprep.subr.mxu0 0.0
      %1454 = vmatpush1.msra.mxu0 0.0
      %1455 = vmatprep.subr.mxu0 0.0
      %1456 = vmatpush1.msra.mxu0 0.0
      %1457 = vmatprep.subr.mxu0 0.0
      %1458 = vmatpush1.msra.mxu0 0.0
      %1459 = vmatprep.subr.mxu0 0.0
      %1460 = vmatpush1.msra.mxu0 0.0
      %1461 = vmatprep.subr.mxu0 0.0
      %1462 = vmatpush1.msra.mxu0 0.0
      %1463 = vmatprep.subr.mxu0 0.0
      %1464 = vmatpush1.msra.mxu0 0.0
      %1465 = vmatprep.subr.mxu0 0.0
      %1466 = vmatpush1.msra.mxu0 0.0
      %1467 = vmatprep.subr.mxu0 0.0
      %1468 = vmatpush1.msra.mxu0 0.0
      %1469 = vmatprep.subr.mxu0 0.0
      %1470 = vmatpush1.msra.mxu0 0.0
      %1471 = vmatprep.subr.mxu0 0.0
      %1472 = vmatpush1.msra.mxu0 0.0
      %1473 = vmatprep.subr.mxu0 0.0
      %1474 = vmatpush1.msra.mxu0 0.0
      %1475 = vmatprep.subr.mxu0 0.0
      %1476 = vmatpush1.msra.mxu0 0.0
      %1477 = vmatprep.subr.mxu0 0.0
      %1478 = vmatpush1.msra.mxu0 0.0
      %1479 = vmatprep.subr.mxu0 0.0
      %1480 = vmatpush1.msra.mxu0 0.0
      %1481 = vmatprep.subr.mxu0 0.0
      %1482 = vmatpush1.msra.mxu0 0.0
      %1483 = vmatprep.subr.mxu0 %v1451
      %1484 = vmatpush1.msra.mxu0 %v1449
      %1485 = vmatprep.subr.mxu0 0.0
      %1486 = vmatpush2.msra.mxu0 0.0
      %1487 = vmatprep.subr.mxu0 0.0
      %1488 = vmatpush2.msra.mxu0 0.0
      %1489 = vmatprep.subr.mxu0 0.0
      %1490 = vmatpush2.msra.mxu0 0.0
      %1491 = vmatprep.subr.mxu0 0.0
      %1492 = vmatpush2.msra.mxu0 0.0
      %1493 = vmatprep.subr.mxu0 0.0
      %1494 = vmatpush2.msra.mxu0 0.0
      %1495 = vmatprep.subr.mxu0 0.0
      %1496 = vmatpush2.msra.mxu0 0.0
      %1497 = vmatprep.subr.mxu0 0.0
      %1498 = vmatpush2.msra.mxu0 0.0
      %1499 = vmatprep.subr.mxu0 0.0
      %1500 = vmatpush2.msra.mxu0 0.0
      %1501 = vmatprep.subr.mxu0 0.0
      %1502 = vmatpush2.msra.mxu0 0.0
      %1503 = vmatprep.subr.mxu0 0.0
      %1504 = vmatpush2.msra.mxu0 0.0
      %1505 = vmatprep.subr.mxu0 0.0
      %1506 = vmatpush2.msra.mxu0 0.0
      %1507 = vmatprep.subr.mxu0 0.0
      %1508 = vmatpush2.msra.mxu0 0.0
      %1509 = vmatprep.subr.mxu0 0.0
      %1510 = vmatpush2.msra.mxu0 0.0
      %1511 = vmatprep.subr.mxu0 0.0
      %1512 = vmatpush2.msra.mxu0 0.0
      %1513 = vmatprep.subr.mxu0 0.0
      %1514 = vmatpush2.msra.mxu0 0.0
      %1515 = vmatprep.subr.mxu0 0.0
      %1516 = vmatpush2.msra.mxu0 0.0
      %1517 = vmatprep.mubr.f32.mxu0 0.0
      %1518 = vmatmul.mubr.f32.gmra.mxu0 %v1447
      %v1519 = vpop.f32.mrf.mxu0
      %v1520 = vadd.f32 0.0, %v1519
      %v1521 = vpop.f32.mrf.mxu0
      %v1522 = vadd.f32 0.0, %v1521
      %1523 = vdwg.mxu0
      %1527 = vrot.lane.b32.xlu0 %v1427, 95
      %v1528 = vpop.permute.xlu0 %1527
      %1529 = vrot.lane.b32.xlu0 %v1428, 95
      %v1530 = vpop.permute.xlu0 %1529
      %1531 = vrot.lane.b32.xlu0 %v1429, 95
      %v1532 = vpop.permute.xlu0 %1531
      %v1533 = vsel %vm1443, %v1528, %v1530
      %v1534 = vsel %vm1443, %v1530, %v1532
      %v1536 = vsel %vm743, %v1426, 0
      %v1538 = vsel %vm747, %v1533, 0
      %v1540 = vsel %vm747, %v1534, 0
      %1542 = vmatprep.subr.mxu0 0.0
      %1543 = vmatpush1.msra.mxu0 0.0
      %1544 = vmatprep.subr.mxu0 0.0
      %1545 = vmatpush1.msra.mxu0 0.0
      %1546 = vmatprep.subr.mxu0 0.0
      %1547 = vmatpush1.msra.mxu0 0.0
      %1548 = vmatprep.subr.mxu0 0.0
      %1549 = vmatpush1.msra.mxu0 0.0
      %1550 = vmatprep.subr.mxu0 0.0
      %1551 = vmatpush1.msra.mxu0 0.0
      %1552 = vmatprep.subr.mxu0 0.0
      %1553 = vmatpush1.msra.mxu0 0.0
      %1554 = vmatprep.subr.mxu0 0.0
      %1555 = vmatpush1.msra.mxu0 0.0
      %1556 = vmatprep.subr.mxu0 0.0
      %1557 = vmatpush1.msra.mxu0 0.0
      %1558 = vmatprep.subr.mxu0 0.0
      %1559 = vmatpush1.msra.mxu0 0.0
      %1560 = vmatprep.subr.mxu0 0.0
      %1561 = vmatpush1.msra.mxu0 0.0
      %1562 = vmatprep.subr.mxu0 0.0
      %1563 = vmatpush1.msra.mxu0 0.0
      %1564 = vmatprep.subr.mxu0 0.0
      %1565 = vmatpush1.msra.mxu0 0.0
      %1566 = vmatprep.subr.mxu0 0.0
      %1567 = vmatpush1.msra.mxu0 0.0
      %1568 = vmatprep.subr.mxu0 0.0
      %1569 = vmatpush1.msra.mxu0 0.0
      %1570 = vmatprep.subr.mxu0 0.0
      %1571 = vmatpush1.msra.mxu0 0.0
      %1572 = vmatprep.subr.mxu0 %v1540
      %1573 = vmatpush1.msra.mxu0 %v1538
      %1574 = vmatprep.subr.mxu0 0.0
      %1575 = vmatpush2.msra.mxu0 0.0
      %1576 = vmatprep.subr.mxu0 0.0
      %1577 = vmatpush2.msra.mxu0 0.0
      %1578 = vmatprep.subr.mxu0 0.0
      %1579 = vmatpush2.msra.mxu0 0.0
      %1580 = vmatprep.subr.mxu0 0.0
      %1581 = vmatpush2.msra.mxu0 0.0
      %1582 = vmatprep.subr.mxu0 0.0
      %1583 = vmatpush2.msra.mxu0 0.0
      %1584 = vmatprep.subr.mxu0 0.0
      %1585 = vmatpush2.msra.mxu0 0.0
      %1586 = vmatprep.subr.mxu0 0.0
      %1587 = vmatpush2.msra.mxu0 0.0
      %1588 = vmatprep.subr.mxu0 0.0
      %1589 = vmatpush2.msra.mxu0 0.0
      %1590 = vmatprep.subr.mxu0 0.0
      %1591 = vmatpush2.msra.mxu0 0.0
      %1592 = vmatprep.subr.mxu0 0.0
      %1593 = vmatpush2.msra.mxu0 0.0
      %1594 = vmatprep.subr.mxu0 0.0
      %1595 = vmatpush2.msra.mxu0 0.0
      %1596 = vmatprep.subr.mxu0 0.0
      %1597 = vmatpush2.msra.mxu0 0.0
      %1598 = vmatprep.subr.mxu0 0.0
      %1599 = vmatpush2.msra.mxu0 0.0
      %1600 = vmatprep.subr.mxu0 0.0
      %1601 = vmatpush2.msra.mxu0 0.0
      %1602 = vmatprep.subr.mxu0 0.0
      %1603 = vmatpush2.msra.mxu0 0.0
      %1604 = vmatprep.subr.mxu0 0.0
      %1605 = vmatpush2.msra.mxu0 0.0
      %1606 = vmatprep.mubr.f32.mxu0 0.0
      %1607 = vmatmul.mubr.f32.gmra.mxu0 %v1536
      %v1608 = vpop.f32.mrf.mxu0
      %v1609 = vadd.f32 %v1520, %v1608
      %v1610 = vpop.f32.mrf.mxu0
      %v1611 = vadd.f32 %v1522, %v1610
      %1612 = vdwg.mxu0
      %v1613 = vadd.f32 %v1423, %v1609
      %v1614 = vadd.f32 %v1424, %v1611
      %s1615 = scalar_lea.vmem %s2, 20
      %v1616 = vld [vmem:[%s1615] sm:$0xf]
      %v1617 = vld [vmem:[#allocation2] sm:$0x3f]
      %v1618 = vld [vmem:[#allocation2 + $0x8] sm:$0x3f]
      %v1619 = vld [vmem:[#allocation2 + $0x10] sm:$0x3f]
      %s1620 = scalar_lea.vmem %s3, 20
      %v1621 = vld [vmem:[%s1620] sm:$0xf]
      %v1622 = vld [vmem:[#allocation3] sm:$0xff]
      %v1623 = vld [vmem:[#allocation3 + $0x8] sm:$0xf]
      %v1626 = vcombine.high %v1622, %v1622
      %1627 = vrot.lane.b32.xlu0 %v1622, 94
      %v1628 = vpop.permute.xlu0 %1627
      %1629 = vrot.lane.b32.xlu0 %v1626, 94
      %v1630 = vpop.permute.xlu0 %1629
      %1631 = vrot.lane.b32.xlu0 %v1623, 94
      %v1632 = vpop.permute.xlu0 %1631
      %vm1633 = vcmask 769024
      %v1634 = vsel %vm1633, %v1628, %v1630
      %v1635 = vsel %vm1633, %v1630, %v1632
      %v1637 = vsel %vm663, %v1621, 0
      %v1639 = vsel %vm667, %v1634, 0
      %v1641 = vsel %vm667, %v1635, 0
      %1643 = vmatprep.subr.mxu0 0.0
      %1644 = vmatpush1.msra.mxu0 0.0
      %1645 = vmatprep.subr.mxu0 0.0
      %1646 = vmatpush1.msra.mxu0 0.0
      %1647 = vmatprep.subr.mxu0 0.0
      %1648 = vmatpush1.msra.mxu0 0.0
      %1649 = vmatprep.subr.mxu0 0.0
      %1650 = vmatpush1.msra.mxu0 0.0
      %1651 = vmatprep.subr.mxu0 0.0
      %1652 = vmatpush1.msra.mxu0 0.0
      %1653 = vmatprep.subr.mxu0 0.0
      %1654 = vmatpush1.msra.mxu0 0.0
      %1655 = vmatprep.subr.mxu0 0.0
      %1656 = vmatpush1.msra.mxu0 0.0
      %1657 = vmatprep.subr.mxu0 0.0
      %1658 = vmatpush1.msra.mxu0 0.0
      %1659 = vmatprep.subr.mxu0 0.0
      %1660 = vmatpush1.msra.mxu0 0.0
      %1661 = vmatprep.subr.mxu0 0.0
      %1662 = vmatpush1.msra.mxu0 0.0
      %1663 = vmatprep.subr.mxu0 0.0
      %1664 = vmatpush1.msra.mxu0 0.0
      %1665 = vmatprep.subr.mxu0 0.0
      %1666 = vmatpush1.msra.mxu0 0.0
      %1667 = vmatprep.subr.mxu0 0.0
      %1668 = vmatpush1.msra.mxu0 0.0
      %1669 = vmatprep.subr.mxu0 0.0
      %1670 = vmatpush1.msra.mxu0 0.0
      %1671 = vmatprep.subr.mxu0 0.0
      %1672 = vmatpush1.msra.mxu0 0.0
      %1673 = vmatprep.subr.mxu0 %v1641
      %1674 = vmatpush1.msra.mxu0 %v1639
      %1675 = vmatprep.subr.mxu0 0.0
      %1676 = vmatpush2.msra.mxu0 0.0
      %1677 = vmatprep.subr.mxu0 0.0
      %1678 = vmatpush2.msra.mxu0 0.0
      %1679 = vmatprep.subr.mxu0 0.0
      %1680 = vmatpush2.msra.mxu0 0.0
      %1681 = vmatprep.subr.mxu0 0.0
      %1682 = vmatpush2.msra.mxu0 0.0
      %1683 = vmatprep.subr.mxu0 0.0
      %1684 = vmatpush2.msra.mxu0 0.0
      %1685 = vmatprep.subr.mxu0 0.0
      %1686 = vmatpush2.msra.mxu0 0.0
      %1687 = vmatprep.subr.mxu0 0.0
      %1688 = vmatpush2.msra.mxu0 0.0
      %1689 = vmatprep.subr.mxu0 0.0
      %1690 = vmatpush2.msra.mxu0 0.0
      %1691 = vmatprep.subr.mxu0 0.0
      %1692 = vmatpush2.msra.mxu0 0.0
      %1693 = vmatprep.subr.mxu0 0.0
      %1694 = vmatpush2.msra.mxu0 0.0
      %1695 = vmatprep.subr.mxu0 0.0
      %1696 = vmatpush2.msra.mxu0 0.0
      %1697 = vmatprep.subr.mxu0 0.0
      %1698 = vmatpush2.msra.mxu0 0.0
      %1699 = vmatprep.subr.mxu0 0.0
      %1700 = vmatpush2.msra.mxu0 0.0
      %1701 = vmatprep.subr.mxu0 0.0
      %1702 = vmatpush2.msra.mxu0 0.0
      %1703 = vmatprep.subr.mxu0 0.0
      %1704 = vmatpush2.msra.mxu0 0.0
      %1705 = vmatprep.subr.mxu0 0.0
      %1706 = vmatpush2.msra.mxu0 0.0
      %1707 = vmatprep.mubr.f32.mxu0 0.0
      %1708 = vmatmul.mubr.f32.gmra.mxu0 %v1637
      %v1709 = vpop.f32.mrf.mxu0
      %v1710 = vadd.f32 0.0, %v1709
      %v1711 = vpop.f32.mrf.mxu0
      %v1712 = vadd.f32 0.0, %v1711
      %1713 = vdwg.mxu0
      %1717 = vrot.lane.b32.xlu0 %v1617, 94
      %v1718 = vpop.permute.xlu0 %1717
      %1719 = vrot.lane.b32.xlu0 %v1618, 94
      %v1720 = vpop.permute.xlu0 %1719
      %1721 = vrot.lane.b32.xlu0 %v1619, 94
      %v1722 = vpop.permute.xlu0 %1721
      %v1723 = vsel %vm1633, %v1718, %v1720
      %v1724 = vsel %vm1633, %v1720, %v1722
      %v1726 = vsel %vm743, %v1616, 0
      %v1728 = vsel %vm747, %v1723, 0
      %v1730 = vsel %vm747, %v1724, 0
      %1732 = vmatprep.subr.mxu0 0.0
      %1733 = vmatpush1.msra.mxu0 0.0
      %1734 = vmatprep.subr.mxu0 0.0
      %1735 = vmatpush1.msra.mxu0 0.0
      %1736 = vmatprep.subr.mxu0 0.0
      %1737 = vmatpush1.msra.mxu0 0.0
      %1738 = vmatprep.subr.mxu0 0.0
      %1739 = vmatpush1.msra.mxu0 0.0
      %1740 = vmatprep.subr.mxu0 0.0
      %1741 = vmatpush1.msra.mxu0 0.0
      %1742 = vmatprep.subr.mxu0 0.0
      %1743 = vmatpush1.msra.mxu0 0.0
      %1744 = vmatprep.subr.mxu0 0.0
      %1745 = vmatpush1.msra.mxu0 0.0
      %1746 = vmatprep.subr.mxu0 0.0
      %1747 = vmatpush1.msra.mxu0 0.0
      %1748 = vmatprep.subr.mxu0 0.0
      %1749 = vmatpush1.msra.mxu0 0.0
      %1750 = vmatprep.subr.mxu0 0.0
      %1751 = vmatpush1.msra.mxu0 0.0
      %1752 = vmatprep.subr.mxu0 0.0
      %1753 = vmatpush1.msra.mxu0 0.0
      %1754 = vmatprep.subr.mxu0 0.0
      %1755 = vmatpush1.msra.mxu0 0.0
      %1756 = vmatprep.subr.mxu0 0.0
      %1757 = vmatpush1.msra.mxu0 0.0
      %1758 = vmatprep.subr.mxu0 0.0
      %1759 = vmatpush1.msra.mxu0 0.0
      %1760 = vmatprep.subr.mxu0 0.0
      %1761 = vmatpush1.msra.mxu0 0.0
      %1762 = vmatprep.subr.mxu0 %v1730
      %1763 = vmatpush1.msra.mxu0 %v1728
      %1764 = vmatprep.subr.mxu0 0.0
      %1765 = vmatpush2.msra.mxu0 0.0
      %1766 = vmatprep.subr.mxu0 0.0
      %1767 = vmatpush2.msra.mxu0 0.0
      %1768 = vmatprep.subr.mxu0 0.0
      %1769 = vmatpush2.msra.mxu0 0.0
      %1770 = vmatprep.subr.mxu0 0.0
      %1771 = vmatpush2.msra.mxu0 0.0
      %1772 = vmatprep.subr.mxu0 0.0
      %1773 = vmatpush2.msra.mxu0 0.0
      %1774 = vmatprep.subr.mxu0 0.0
      %1775 = vmatpush2.msra.mxu0 0.0
      %1776 = vmatprep.subr.mxu0 0.0
      %1777 = vmatpush2.msra.mxu0 0.0
      %1778 = vmatprep.subr.mxu0 0.0
      %1779 = vmatpush2.msra.mxu0 0.0
      %1780 = vmatprep.subr.mxu0 0.0
      %1781 = vmatpush2.msra.mxu0 0.0
      %1782 = vmatprep.subr.mxu0 0.0
      %1783 = vmatpush2.msra.mxu0 0.0
      %1784 = vmatprep.subr.mxu0 0.0
      %1785 = vmatpush2.msra.mxu0 0.0
      %1786 = vmatprep.subr.mxu0 0.0
      %1787 = vmatpush2.msra.mxu0 0.0
      %1788 = vmatprep.subr.mxu0 0.0
      %1789 = vmatpush2.msra.mxu0 0.0
      %1790 = vmatprep.subr.mxu0 0.0
      %1791 = vmatpush2.msra.mxu0 0.0
      %1792 = vmatprep.subr.mxu0 0.0
      %1793 = vmatpush2.msra.mxu0 0.0
      %1794 = vmatprep.subr.mxu0 0.0
      %1795 = vmatpush2.msra.mxu0 0.0
      %1796 = vmatprep.mubr.f32.mxu0 0.0
      %1797 = vmatmul.mubr.f32.gmra.mxu0 %v1726
      %v1798 = vpop.f32.mrf.mxu0
      %v1799 = vadd.f32 %v1710, %v1798
      %v1800 = vpop.f32.mrf.mxu0
      %v1801 = vadd.f32 %v1712, %v1800
      %1802 = vdwg.mxu0
      %v1803 = vmul.f32 %v1799, %v1222
      %v1804 = vmul.f32 %v1801, %v1226
      %v1805 = vadd.f32 %v1613, %v1803
      %v1806 = vadd.f32 %v1614, %v1804
      %s1807 = scalar_lea.vmem %s2, 24
      %v1808 = vld [vmem:[%s1807] sm:$0xf]
      %v1809 = vld [vmem:[#allocation2] sm:$0x3f]
      %v1810 = vld [vmem:[#allocation2 + $0x8] sm:$0x3f]
      %v1811 = vld [vmem:[#allocation2 + $0x10] sm:$0x3f]
      %s1812 = scalar_lea.vmem %s3, 24
      %v1813 = vld [vmem:[%s1812] sm:$0xf]
      %v1814 = vld [vmem:[#allocation3] sm:$0xff]
      %v1815 = vld [vmem:[#allocation3 + $0x8] sm:$0xf]
      %v1818 = vcombine.high %v1814, %v1814
      %1819 = vrot.lane.b32.xlu0 %v1814, 64
      %v1820 = vpop.permute.xlu0 %1819
      %1821 = vrot.lane.b32.xlu0 %v1818, 64
      %v1822 = vpop.permute.xlu0 %1821
      %1823 = vrot.lane.b32.xlu0 %v1815, 64
      %v1824 = vpop.permute.xlu0 %1823
      %vm1825 = vcmask 523264
      %v1826 = vsel %vm1825, %v1820, %v1822
      %v1827 = vsel %vm1825, %v1822, %v1824
      %v1829 = vsel %vm663, %v1813, 0
      %v1831 = vsel %vm667, %v1826, 0
      %v1833 = vsel %vm667, %v1827, 0
      %1835 = vmatprep.subr.mxu0 0.0
      %1836 = vmatpush1.msra.mxu0 0.0
      %1837 = vmatprep.subr.mxu0 0.0
      %1838 = vmatpush1.msra.mxu0 0.0
      %1839 = vmatprep.subr.mxu0 0.0
      %1840 = vmatpush1.msra.mxu0 0.0
      %1841 = vmatprep.subr.mxu0 0.0
      %1842 = vmatpush1.msra.mxu0 0.0
      %1843 = vmatprep.subr.mxu0 0.0
      %1844 = vmatpush1.msra.mxu0 0.0
      %1845 = vmatprep.subr.mxu0 0.0
      %1846 = vmatpush1.msra.mxu0 0.0
      %1847 = vmatprep.subr.mxu0 0.0
      %1848 = vmatpush1.msra.mxu0 0.0
      %1849 = vmatprep.subr.mxu0 0.0
      %1850 = vmatpush1.msra.mxu0 0.0
      %1851 = vmatprep.subr.mxu0 0.0
      %1852 = vmatpush1.msra.mxu0 0.0
      %1853 = vmatprep.subr.mxu0 0.0
      %1854 = vmatpush1.msra.mxu0 0.0
      %1855 = vmatprep.subr.mxu0 0.0
      %1856 = vmatpush1.msra.mxu0 0.0
      %1857 = vmatprep.subr.mxu0 0.0
      %1858 = vmatpush1.msra.mxu0 0.0
      %1859 = vmatprep.subr.mxu0 0.0
      %1860 = vmatpush1.msra.mxu0 0.0
      %1861 = vmatprep.subr.mxu0 0.0
      %1862 = vmatpush1.msra.mxu0 0.0
      %1863 = vmatprep.subr.mxu0 0.0
      %1864 = vmatpush1.msra.mxu0 0.0
      %1865 = vmatprep.subr.mxu0 %v1833
      %1866 = vmatpush1.msra.mxu0 %v1831
      %1867 = vmatprep.subr.mxu0 0.0
      %1868 = vmatpush2.msra.mxu0 0.0
      %1869 = vmatprep.subr.mxu0 0.0
      %1870 = vmatpush2.msra.mxu0 0.0
      %1871 = vmatprep.subr.mxu0 0.0
      %1872 = vmatpush2.msra.mxu0 0.0
      %1873 = vmatprep.subr.mxu0 0.0
      %1874 = vmatpush2.msra.mxu0 0.0
      %1875 = vmatprep.subr.mxu0 0.0
      %1876 = vmatpush2.msra.mxu0 0.0
      %1877 = vmatprep.subr.mxu0 0.0
      %1878 = vmatpush2.msra.mxu0 0.0
      %1879 = vmatprep.subr.mxu0 0.0
      %1880 = vmatpush2.msra.mxu0 0.0
      %1881 = vmatprep.subr.mxu0 0.0
      %1882 = vmatpush2.msra.mxu0 0.0
      %1883 = vmatprep.subr.mxu0 0.0
      %1884 = vmatpush2.msra.mxu0 0.0
      %1885 = vmatprep.subr.mxu0 0.0
      %1886 = vmatpush2.msra.mxu0 0.0
      %1887 = vmatprep.subr.mxu0 0.0
      %1888 = vmatpush2.msra.mxu0 0.0
      %1889 = vmatprep.subr.mxu0 0.0
      %1890 = vmatpush2.msra.mxu0 0.0
      %1891 = vmatprep.subr.mxu0 0.0
      %1892 = vmatpush2.msra.mxu0 0.0
      %1893 = vmatprep.subr.mxu0 0.0
      %1894 = vmatpush2.msra.mxu0 0.0
      %1895 = vmatprep.subr.mxu0 0.0
      %1896 = vmatpush2.msra.mxu0 0.0
      %1897 = vmatprep.subr.mxu0 0.0
      %1898 = vmatpush2.msra.mxu0 0.0
      %1899 = vmatprep.mubr.f32.mxu0 0.0
      %1900 = vmatmul.mubr.f32.gmra.mxu0 %v1829
      %v1901 = vpop.f32.mrf.mxu0
      %v1902 = vadd.f32 0.0, %v1901
      %v1903 = vpop.f32.mrf.mxu0
      %v1904 = vadd.f32 0.0, %v1903
      %1905 = vdwg.mxu0
      %1909 = vrot.lane.b32.xlu0 %v1809, 64
      %v1910 = vpop.permute.xlu0 %1909
      %1911 = vrot.lane.b32.xlu0 %v1810, 64
      %v1912 = vpop.permute.xlu0 %1911
      %1913 = vrot.lane.b32.xlu0 %v1811, 64
      %v1914 = vpop.permute.xlu0 %1913
      %v1915 = vsel %vm1825, %v1910, %v1912
      %v1916 = vsel %vm1825, %v1912, %v1914
      %v1918 = vsel %vm743, %v1808, 0
      %v1920 = vsel %vm747, %v1915, 0
      %v1922 = vsel %vm747, %v1916, 0
      %1924 = vmatprep.subr.mxu0 0.0
      %1925 = vmatpush1.msra.mxu0 0.0
      %1926 = vmatprep.subr.mxu0 0.0
      %1927 = vmatpush1.msra.mxu0 0.0
      %1928 = vmatprep.subr.mxu0 0.0
      %1929 = vmatpush1.msra.mxu0 0.0
      %1930 = vmatprep.subr.mxu0 0.0
      %1931 = vmatpush1.msra.mxu0 0.0
      %1932 = vmatprep.subr.mxu0 0.0
      %1933 = vmatpush1.msra.mxu0 0.0
      %1934 = vmatprep.subr.mxu0 0.0
      %1935 = vmatpush1.msra.mxu0 0.0
      %1936 = vmatprep.subr.mxu0 0.0
      %1937 = vmatpush1.msra.mxu0 0.0
      %1938 = vmatprep.subr.mxu0 0.0
      %1939 = vmatpush1.msra.mxu0 0.0
      %1940 = vmatprep.subr.mxu0 0.0
      %1941 = vmatpush1.msra.mxu0 0.0
      %1942 = vmatprep.subr.mxu0 0.0
      %1943 = vmatpush1.msra.mxu0 0.0
      %1944 = vmatprep.subr.mxu0 0.0
      %1945 = vmatpush1.msra.mxu0 0.0
      %1946 = vmatprep.subr.mxu0 0.0
      %1947 = vmatpush1.msra.mxu0 0.0
      %1948 = vmatprep.subr.mxu0 0.0
      %1949 = vmatpush1.msra.mxu0 0.0
      %1950 = vmatprep.subr.mxu0 0.0
      %1951 = vmatpush1.msra.mxu0 0.0
      %1952 = vmatprep.subr.mxu0 0.0
      %1953 = vmatpush1.msra.mxu0 0.0
      %1954 = vmatprep.subr.mxu0 %v1922
      %1955 = vmatpush1.msra.mxu0 %v1920
      %1956 = vmatprep.subr.mxu0 0.0
      %1957 = vmatpush2.msra.mxu0 0.0
      %1958 = vmatprep.subr.mxu0 0.0
      %1959 = vmatpush2.msra.mxu0 0.0
      %1960 = vmatprep.subr.mxu0 0.0
      %1961 = vmatpush2.msra.mxu0 0.0
      %1962 = vmatprep.subr.mxu0 0.0
      %1963 = vmatpush2.msra.mxu0 0.0
      %1964 = vmatprep.subr.mxu0 0.0
      %1965 = vmatpush2.msra.mxu0 0.0
      %1966 = vmatprep.subr.mxu0 0.0
      %1967 = vmatpush2.msra.mxu0 0.0
      %1968 = vmatprep.subr.mxu0 0.0
      %1969 = vmatpush2.msra.mxu0 0.0
      %1970 = vmatprep.subr.mxu0 0.0
      %1971 = vmatpush2.msra.mxu0 0.0
      %1972 = vmatprep.subr.mxu0 0.0
      %1973 = vmatpush2.msra.mxu0 0.0
      %1974 = vmatprep.subr.mxu0 0.0
      %1975 = vmatpush2.msra.mxu0 0.0
      %1976 = vmatprep.subr.mxu0 0.0
      %1977 = vmatpush2.msra.mxu0 0.0
      %1978 = vmatprep.subr.mxu0 0.0
      %1979 = vmatpush2.msra.mxu0 0.0
      %1980 = vmatprep.subr.mxu0 0.0
      %1981 = vmatpush2.msra.mxu0 0.0
      %1982 = vmatprep.subr.mxu0 0.0
      %1983 = vmatpush2.msra.mxu0 0.0
      %1984 = vmatprep.subr.mxu0 0.0
      %1985 = vmatpush2.msra.mxu0 0.0
      %1986 = vmatprep.subr.mxu0 0.0
      %1987 = vmatpush2.msra.mxu0 0.0
      %1988 = vmatprep.mubr.f32.mxu0 0.0
      %1989 = vmatmul.mubr.f32.gmra.mxu0 %v1918
      %v1990 = vpop.f32.mrf.mxu0
      %v1991 = vadd.f32 %v1902, %v1990
      %v1992 = vpop.f32.mrf.mxu0
      %v1993 = vadd.f32 %v1904, %v1992
      %1994 = vdwg.mxu0
      %v1995 = vmul.f32 %v1991, %v829
      %v1996 = vmul.f32 %v1993, %v833
      %v1997 = vadd.f32 %v1805, %v1995
      %v1998 = vadd.f32 %v1806, %v1996
      %s1999 = scalar_lea.vmem %s2, 28
      %v2000 = vld [vmem:[%s1999] sm:$0xf]
      %v2001 = vld [vmem:[#allocation2] sm:$0x3f]
      %v2002 = vld [vmem:[#allocation2 + $0x8] sm:$0x3f]
      %v2003 = vld [vmem:[#allocation2 + $0x10] sm:$0x3f]
      %s2004 = scalar_lea.vmem %s3, 28
      %v2005 = vld [vmem:[%s2004] sm:$0xf]
      %v2006 = vld [vmem:[#allocation3] sm:$0xff]
      %v2007 = vld [vmem:[#allocation3 + $0x8] sm:$0xf]
      %v2010 = vcombine.high %v2006, %v2006
      %2011 = vrot.lane.b32.xlu0 %v2006, 63
      %v2012 = vpop.permute.xlu0 %2011
      %2013 = vrot.lane.b32.xlu0 %v2010, 63
      %v2014 = vpop.permute.xlu0 %2013
      %2015 = vrot.lane.b32.xlu0 %v2007, 63
      %v2016 = vpop.permute.xlu0 %2015
      %vm2017 = vcmask 515072
      %v2018 = vsel %vm2017, %v2012, %v2014
      %v2019 = vsel %vm2017, %v2014, %v2016
      %v2021 = vsel %vm663, %v2005, 0
      %v2023 = vsel %vm667, %v2018, 0
      %v2025 = vsel %vm667, %v2019, 0
      %2027 = vmatprep.subr.mxu0 0.0
      %2028 = vmatpush1.msra.mxu0 0.0
      %2029 = vmatprep.subr.mxu0 0.0
      %2030 = vmatpush1.msra.mxu0 0.0
      %2031 = vmatprep.subr.mxu0 0.0
      %2032 = vmatpush1.msra.mxu0 0.0
      %2033 = vmatprep.subr.mxu0 0.0
      %2034 = vmatpush1.msra.mxu0 0.0
      %2035 = vmatprep.subr.mxu0 0.0
      %2036 = vmatpush1.msra.mxu0 0.0
      %2037 = vmatprep.subr.mxu0 0.0
      %2038 = vmatpush1.msra.mxu0 0.0
      %2039 = vmatprep.subr.mxu0 0.0
      %2040 = vmatpush1.msra.mxu0 0.0
      %2041 = vmatprep.subr.mxu0 0.0
      %2042 = vmatpush1.msra.mxu0 0.0
      %2043 = vmatprep.subr.mxu0 0.0
      %2044 = vmatpush1.msra.mxu0 0.0
      %2045 = vmatprep.subr.mxu0 0.0
      %2046 = vmatpush1.msra.mxu0 0.0
      %2047 = vmatprep.subr.mxu0 0.0
      %2048 = vmatpush1.msra.mxu0 0.0
      %2049 = vmatprep.subr.mxu0 0.0
      %2050 = vmatpush1.msra.mxu0 0.0
      %2051 = vmatprep.subr.mxu0 0.0
      %2052 = vmatpush1.msra.mxu0 0.0
      %2053 = vmatprep.subr.mxu0 0.0
      %2054 = vmatpush1.msra.mxu0 0.0
      %2055 = vmatprep.subr.mxu0 0.0
      %2056 = vmatpush1.msra.mxu0 0.0
      %2057 = vmatprep.subr.mxu0 %v2025
      %2058 = vmatpush1.msra.mxu0 %v2023
      %2059 = vmatprep.subr.mxu0 0.0
      %2060 = vmatpush2.msra.mxu0 0.0
      %2061 = vmatprep.subr.mxu0 0.0
      %2062 = vmatpush2.msra.mxu0 0.0
      %2063 = vmatprep.subr.mxu0 0.0
      %2064 = vmatpush2.msra.mxu0 0.0
      %2065 = vmatprep.subr.mxu0 0.0
      %2066 = vmatpush2.msra.mxu0 0.0
      %2067 = vmatprep.subr.mxu0 0.0
      %2068 = vmatpush2.msra.mxu0 0.0
      %2069 = vmatprep.subr.mxu0 0.0
      %2070 = vmatpush2.msra.mxu0 0.0
      %2071 = vmatprep.subr.mxu0 0.0
      %2072 = vmatpush2.msra.mxu0 0.0
      %2073 = vmatprep.subr.mxu0 0.0
      %2074 = vmatpush2.msra.mxu0 0.0
      %2075 = vmatprep.subr.mxu0 0.0
      %2076 = vmatpush2.msra.mxu0 0.0
      %2077 = vmatprep.subr.mxu0 0.0
      %2078 = vmatpush2.msra.mxu0 0.0
      %2079 = vmatprep.subr.mxu0 0.0
      %2080 = vmatpush2.msra.mxu0 0.0
      %2081 = vmatprep.subr.mxu0 0.0
      %2082 = vmatpush2.msra.mxu0 0.0
      %2083 = vmatprep.subr.mxu0 0.0
      %2084 = vmatpush2.msra.mxu0 0.0
      %2085 = vmatprep.subr.mxu0 0.0
      %2086 = vmatpush2.msra.mxu0 0.0
      %2087 = vmatprep.subr.mxu0 0.0
      %2088 = vmatpush2.msra.mxu0 0.0
      %2089 = vmatprep.subr.mxu0 0.0
      %2090 = vmatpush2.msra.mxu0 0.0
      %2091 = vmatprep.mubr.f32.mxu0 0.0
      %2092 = vmatmul.mubr.f32.gmra.mxu0 %v2021
      %v2093 = vpop.f32.mrf.mxu0
      %v2094 = vadd.f32 0.0, %v2093
      %v2095 = vpop.f32.mrf.mxu0
      %v2096 = vadd.f32 0.0, %v2095
      %2097 = vdwg.mxu0
      %2101 = vrot.lane.b32.xlu0 %v2001, 63
      %v2102 = vpop.permute.xlu0 %2101
      %2103 = vrot.lane.b32.xlu0 %v2002, 63
      %v2104 = vpop.permute.xlu0 %2103
      %2105 = vrot.lane.b32.xlu0 %v2003, 63
      %v2106 = vpop.permute.xlu0 %2105
      %v2107 = vsel %vm2017, %v2102, %v2104
      %v2108 = vsel %vm2017, %v2104, %v2106
      %v2110 = vsel %vm743, %v2000, 0
      %v2112 = vsel %vm747, %v2107, 0
      %v2114 = vsel %vm747, %v2108, 0
      %2116 = vmatprep.subr.mxu0 0.0
      %2117 = vmatpush1.msra.mxu0 0.0
      %2118 = vmatprep.subr.mxu0 0.0
      %2119 = vmatpush1.msra.mxu0 0.0
      %2120 = vmatprep.subr.mxu0 0.0
      %2121 = vmatpush1.msra.mxu0 0.0
      %2122 = vmatprep.subr.mxu0 0.0
      %2123 = vmatpush1.msra.mxu0 0.0
      %2124 = vmatprep.subr.mxu0 0.0
      %2125 = vmatpush1.msra.mxu0 0.0
      %2126 = vmatprep.subr.mxu0 0.0
      %2127 = vmatpush1.msra.mxu0 0.0
      %2128 = vmatprep.subr.mxu0 0.0
      %2129 = vmatpush1.msra.mxu0 0.0
      %2130 = vmatprep.subr.mxu0 0.0
      %2131 = vmatpush1.msra.mxu0 0.0
      %2132 = vmatprep.subr.mxu0 0.0
      %2133 = vmatpush1.msra.mxu0 0.0
      %2134 = vmatprep.subr.mxu0 0.0
      %2135 = vmatpush1.msra.mxu0 0.0
      %2136 = vmatprep.subr.mxu0 0.0
      %2137 = vmatpush1.msra.mxu0 0.0
      %2138 = vmatprep.subr.mxu0 0.0
      %2139 = vmatpush1.msra.mxu0 0.0
      %2140 = vmatprep.subr.mxu0 0.0
      %2141 = vmatpush1.msra.mxu0 0.0
      %2142 = vmatprep.subr.mxu0 0.0
      %2143 = vmatpush1.msra.mxu0 0.0
      %2144 = vmatprep.subr.mxu0 0.0
      %2145 = vmatpush1.msra.mxu0 0.0
      %2146 = vmatprep.subr.mxu0 %v2114
      %2147 = vmatpush1.msra.mxu0 %v2112
      %2148 = vmatprep.subr.mxu0 0.0
      %2149 = vmatpush2.msra.mxu0 0.0
      %2150 = vmatprep.subr.mxu0 0.0
      %2151 = vmatpush2.msra.mxu0 0.0
      %2152 = vmatprep.subr.mxu0 0.0
      %2153 = vmatpush2.msra.mxu0 0.0
      %2154 = vmatprep.subr.mxu0 0.0
      %2155 = vmatpush2.msra.mxu0 0.0
      %2156 = vmatprep.subr.mxu0 0.0
      %2157 = vmatpush2.msra.mxu0 0.0
      %2158 = vmatprep.subr.mxu0 0.0
      %2159 = vmatpush2.msra.mxu0 0.0
      %2160 = vmatprep.subr.mxu0 0.0
      %2161 = vmatpush2.msra.mxu0 0.0
      %2162 = vmatprep.subr.mxu0 0.0
      %2163 = vmatpush2.msra.mxu0 0.0
      %2164 = vmatprep.subr.mxu0 0.0
      %2165 = vmatpush2.msra.mxu0 0.0
      %2166 = vmatprep.subr.mxu0 0.0
      %2167 = vmatpush2.msra.mxu0 0.0
      %2168 = vmatprep.subr.mxu0 0.0
      %2169 = vmatpush2.msra.mxu0 0.0
      %2170 = vmatprep.subr.mxu0 0.0
      %2171 = vmatpush2.msra.mxu0 0.0
      %2172 = vmatprep.subr.mxu0 0.0
      %2173 = vmatpush2.msra.mxu0 0.0
      %2174 = vmatprep.subr.mxu0 0.0
      %2175 = vmatpush2.msra.mxu0 0.0
      %2176 = vmatprep.subr.mxu0 0.0
      %2177 = vmatpush2.msra.mxu0 0.0
      %2178 = vmatprep.subr.mxu0 0.0
      %2179 = vmatpush2.msra.mxu0 0.0
      %2180 = vmatprep.mubr.f32.mxu0 0.0
      %2181 = vmatmul.mubr.f32.gmra.mxu0 %v2110
      %v2182 = vpop.f32.mrf.mxu0
      %v2183 = vadd.f32 %v2094, %v2182
      %v2184 = vpop.f32.mrf.mxu0
      %v2185 = vadd.f32 %v2096, %v2184
      %2186 = vdwg.mxu0
      %v2187 = vadd.f32 %v1997, %v2183
      %v2188 = vadd.f32 %v1998, %v2185
      %s2189 = scalar_lea.vmem %s2, 32
      %v2190 = vld [vmem:[%s2189] sm:$0xf]
      %v2191 = vld [vmem:[#allocation2] sm:$0x3f]
      %v2192 = vld [vmem:[#allocation2 + $0x8] sm:$0x3f]
      %v2193 = vld [vmem:[#allocation2 + $0x10] sm:$0x3f]
      %s2194 = scalar_lea.vmem %s3, 32
      %v2195 = vld [vmem:[%s2194] sm:$0xf]
      %v2196 = vld [vmem:[#allocation3] sm:$0xff]
      %v2197 = vld [vmem:[#allocation3 + $0x8] sm:$0xf]
      %v2200 = vcombine.high %v2196, %v2196
      %2201 = vrot.lane.b32.xlu0 %v2196, 62
      %v2202 = vpop.permute.xlu0 %2201
      %2203 = vrot.lane.b32.xlu0 %v2200, 62
      %v2204 = vpop.permute.xlu0 %2203
      %2205 = vrot.lane.b32.xlu0 %v2197, 62
      %v2206 = vpop.permute.xlu0 %2205
      %vm2207 = vcmask 506880
      %v2208 = vsel %vm2207, %v2202, %v2204
      %v2209 = vsel %vm2207, %v2204, %v2206
      %v2211 = vsel %vm663, %v2195, 0
      %v2213 = vsel %vm667, %v2208, 0
      %v2215 = vsel %vm667, %v2209, 0
      %2217 = vmatprep.subr.mxu0 0.0
      %2218 = vmatpush1.msra.mxu0 0.0
      %2219 = vmatprep.subr.mxu0 0.0
      %2220 = vmatpush1.msra.mxu0 0.0
      %2221 = vmatprep.subr.mxu0 0.0
      %2222 = vmatpush1.msra.mxu0 0.0
      %2223 = vmatprep.subr.mxu0 0.0
      %2224 = vmatpush1.msra.mxu0 0.0
      %2225 = vmatprep.subr.mxu0 0.0
      %2226 = vmatpush1.msra.mxu0 0.0
      %2227 = vmatprep.subr.mxu0 0.0
      %2228 = vmatpush1.msra.mxu0 0.0
      %2229 = vmatprep.subr.mxu0 0.0
      %2230 = vmatpush1.msra.mxu0 0.0
      %2231 = vmatprep.subr.mxu0 0.0
      %2232 = vmatpush1.msra.mxu0 0.0
      %2233 = vmatprep.subr.mxu0 0.0
      %2234 = vmatpush1.msra.mxu0 0.0
      %2235 = vmatprep.subr.mxu0 0.0
      %2236 = vmatpush1.msra.mxu0 0.0
      %2237 = vmatprep.subr.mxu0 0.0
      %2238 = vmatpush1.msra.mxu0 0.0
      %2239 = vmatprep.subr.mxu0 0.0
      %2240 = vmatpush1.msra.mxu0 0.0
      %2241 = vmatprep.subr.mxu0 0.0
      %2242 = vmatpush1.msra.mxu0 0.0
      %2243 = vmatprep.subr.mxu0 0.0
      %2244 = vmatpush1.msra.mxu0 0.0
      %2245 = vmatprep.subr.mxu0 0.0
      %2246 = vmatpush1.msra.mxu0 0.0
      %2247 = vmatprep.subr.mxu0 %v2215
      %2248 = vmatpush1.msra.mxu0 %v2213
      %2249 = vmatprep.subr.mxu0 0.0
      %2250 = vmatpush2.msra.mxu0 0.0
      %2251 = vmatprep.subr.mxu0 0.0
      %2252 = vmatpush2.msra.mxu0 0.0
      %2253 = vmatprep.subr.mxu0 0.0
      %2254 = vmatpush2.msra.mxu0 0.0
      %2255 = vmatprep.subr.mxu0 0.0
      %2256 = vmatpush2.msra.mxu0 0.0
      %2257 = vmatprep.subr.mxu0 0.0
      %2258 = vmatpush2.msra.mxu0 0.0
      %2259 = vmatprep.subr.mxu0 0.0
      %2260 = vmatpush2.msra.mxu0 0.0
      %2261 = vmatprep.subr.mxu0 0.0
      %2262 = vmatpush2.msra.mxu0 0.0
      %2263 = vmatprep.subr.mxu0 0.0
      %2264 = vmatpush2.msra.mxu0 0.0
      %2265 = vmatprep.subr.mxu0 0.0
      %2266 = vmatpush2.msra.mxu0 0.0
      %2267 = vmatprep.subr.mxu0 0.0
      %2268 = vmatpush2.msra.mxu0 0.0
      %2269 = vmatprep.subr.mxu0 0.0
      %2270 = vmatpush2.msra.mxu0 0.0
      %2271 = vmatprep.subr.mxu0 0.0
      %2272 = vmatpush2.msra.mxu0 0.0
      %2273 = vmatprep.subr.mxu0 0.0
      %2274 = vmatpush2.msra.mxu0 0.0
      %2275 = vmatprep.subr.mxu0 0.0
      %2276 = vmatpush2.msra.mxu0 0.0
      %2277 = vmatprep.subr.mxu0 0.0
      %2278 = vmatpush2.msra.mxu0 0.0
      %2279 = vmatprep.subr.mxu0 0.0
      %2280 = vmatpush2.msra.mxu0 0.0
      %2281 = vmatprep.mubr.f32.mxu0 0.0
      %2282 = vmatmul.mubr.f32.gmra.mxu0 %v2211
      %v2283 = vpop.f32.mrf.mxu0
      %v2284 = vadd.f32 0.0, %v2283
      %v2285 = vpop.f32.mrf.mxu0
      %v2286 = vadd.f32 0.0, %v2285
      %2287 = vdwg.mxu0
      %2291 = vrot.lane.b32.xlu0 %v2191, 62
      %v2292 = vpop.permute.xlu0 %2291
      %2293 = vrot.lane.b32.xlu0 %v2192, 62
      %v2294 = vpop.permute.xlu0 %2293
      %2295 = vrot.lane.b32.xlu0 %v2193, 62
      %v2296 = vpop.permute.xlu0 %2295
      %v2297 = vsel %vm2207, %v2292, %v2294
      %v2298 = vsel %vm2207, %v2294, %v2296
      %v2300 = vsel %vm743, %v2190, 0
      %v2302 = vsel %vm747, %v2297, 0
      %v2304 = vsel %vm747, %v2298, 0
      %2306 = vmatprep.subr.mxu0 0.0
      %2307 = vmatpush1.msra.mxu0 0.0
      %2308 = vmatprep.subr.mxu0 0.0
      %2309 = vmatpush1.msra.mxu0 0.0
      %2310 = vmatprep.subr.mxu0 0.0
      %2311 = vmatpush1.msra.mxu0 0.0
      %2312 = vmatprep.subr.mxu0 0.0
      %2313 = vmatpush1.msra.mxu0 0.0
      %2314 = vmatprep.subr.mxu0 0.0
      %2315 = vmatpush1.msra.mxu0 0.0
      %2316 = vmatprep.subr.mxu0 0.0
      %2317 = vmatpush1.msra.mxu0 0.0
      %2318 = vmatprep.subr.mxu0 0.0
      %2319 = vmatpush1.msra.mxu0 0.0
      %2320 = vmatprep.subr.mxu0 0.0
      %2321 = vmatpush1.msra.mxu0 0.0
      %2322 = vmatprep.subr.mxu0 0.0
      %2323 = vmatpush1.msra.mxu0 0.0
      %2324 = vmatprep.subr.mxu0 0.0
      %2325 = vmatpush1.msra.mxu0 0.0
      %2326 = vmatprep.subr.mxu0 0.0
      %2327 = vmatpush1.msra.mxu0 0.0
      %2328 = vmatprep.subr.mxu0 0.0
      %2329 = vmatpush1.msra.mxu0 0.0
      %2330 = vmatprep.subr.mxu0 0.0
      %2331 = vmatpush1.msra.mxu0 0.0
      %2332 = vmatprep.subr.mxu0 0.0
      %2333 = vmatpush1.msra.mxu0 0.0
      %2334 = vmatprep.subr.mxu0 0.0
      %2335 = vmatpush1.msra.mxu0 0.0
      %2336 = vmatprep.subr.mxu0 %v2304
      %2337 = vmatpush1.msra.mxu0 %v2302
      %2338 = vmatprep.subr.mxu0 0.0
      %2339 = vmatpush2.msra.mxu0 0.0
      %2340 = vmatprep.subr.mxu0 0.0
      %2341 = vmatpush2.msra.mxu0 0.0
      %2342 = vmatprep.subr.mxu0 0.0
      %2343 = vmatpush2.msra.mxu0 0.0
      %2344 = vmatprep.subr.mxu0 0.0
      %2345 = vmatpush2.msra.mxu0 0.0
      %2346 = vmatprep.subr.mxu0 0.0
      %2347 = vmatpush2.msra.mxu0 0.0
      %2348 = vmatprep.subr.mxu0 0.0
      %2349 = vmatpush2.msra.mxu0 0.0
      %2350 = vmatprep.subr.mxu0 0.0
      %2351 = vmatpush2.msra.mxu0 0.0
      %2352 = vmatprep.subr.mxu0 0.0
      %2353 = vmatpush2.msra.mxu0 0.0
      %2354 = vmatprep.subr.mxu0 0.0
      %2355 = vmatpush2.msra.mxu0 0.0
      %2356 = vmatprep.subr.mxu0 0.0
      %2357 = vmatpush2.msra.mxu0 0.0
      %2358 = vmatprep.subr.mxu0 0.0
      %2359 = vmatpush2.msra.mxu0 0.0
      %2360 = vmatprep.subr.mxu0 0.0
      %2361 = vmatpush2.msra.mxu0 0.0
      %2362 = vmatprep.subr.mxu0 0.0
      %2363 = vmatpush2.msra.mxu0 0.0
      %2364 = vmatprep.subr.mxu0 0.0
      %2365 = vmatpush2.msra.mxu0 0.0
      %2366 = vmatprep.subr.mxu0 0.0
      %2367 = vmatpush2.msra.mxu0 0.0
      %2368 = vmatprep.subr.mxu0 0.0
      %2369 = vmatpush2.msra.mxu0 0.0
      %2370 = vmatprep.mubr.f32.mxu0 0.0
      %2371 = vmatmul.mubr.f32.gmra.mxu0 %v2300
      %v2372 = vpop.f32.mrf.mxu0
      %v2373 = vadd.f32 %v2284, %v2372
      %v2374 = vpop.f32.mrf.mxu0
      %v2375 = vadd.f32 %v2286, %v2374
      %2376 = vdwg.mxu0
      %v2377 = vmul.f32 %v2373, %v1222
      %v2378 = vmul.f32 %v2375, %v1226
      %v2379 = vadd.f32 %v2187, %v2377
      %v2380 = vadd.f32 %v2188, %v2378
      %v2381 = vld [vmem:[%s4] sm:$0xf]
      %2383 = vset.pattern.permute.xlu0 0
      %2384 = vperm.xlu0 %2383, %v2381
      %v2385 = vpop.permute.xlu0 %2384
      %v2387 = vadd.f32 %v2379, %v2385
      %v2388 = vadd.f32 %v2380, %v2385
      %v2389 = vxor.u32 %v2387, 2147483648
      %v2390 = vxor.u32 %v2388, 2147483648
      %v2391 = vmul.f32 %v2389, 1.442695
      %v2392 = vpow.pop %v2391
      %v2393 = vmul.f32 %v2390, 1.442695
      %v2394 = vpow.pop %v2393
      %v2395 = vadd.f32 %v2392, 1.0
      %v2396 = vadd.f32 %v2394, 1.0
      %v2397 = vrcp.pop %v2395
      %v2398 = vmul.f32 1.0, %v2397
      %v2399 = vrcp.pop %v2396
      %v2400 = vmul.f32 1.0, %v2399
      %v2403 = vcombine.low %v2398, %v2400
      %2405 = vst [vmem:[%s584] sm:$0xff] %v2403
      %s2406 = smul.u32 2, %s27
      %p2407 = scmp.lt.s32.totalorder %s26, 1
      %s2408 = scalar_select %p2407, %s26, 1
      %p2409 = scmp.lt.s32.totalorder %s2406, 7
      %s2410 = scalar_select %p2409, %s2406, 7
      %s2411 = smul.addr %s2408, 8
      %s2412 = sadd.s32 %s2410, %s2411
      %s2413 = smul.addr %s2412, 4
      %s2414 = scalar_lea.vmem %s11, %s2413
      // Predicated region
      $region65: #{unet_out_up_pallas.1} parent=63 // pred_check
        %p2415 = pneg %p327
      $region66: #{unet_out_up_pallas.1} parent=63 // pred_check_branch
        %2417 = sbr.rel (%p2415) target = $region68
      $region67: #{unet_out_up_pallas.1} parent=63 // pred_region
        %s2418 = smul.u32 2, %s27
      $region68: #{unet_out_up_pallas.1} parent=63 // pred_fallthru
        _
    $region64: #{unet_out_up_pallas.1} parent=5 // pred_fallthru
      _
    %p2419 = scmp.le.s32.totalorder 2, %s17
    // Predicated region
    $region69: #{unet_out_up_pallas.1} parent=5 // pred_check
      %p2420 = pneg %p2419
    $region70: #{unet_out_up_pallas.1} parent=5 // pred_check_branch
      %2422 = sbr.rel (%p2420) target = $region72
    $region71: #{unet_out_up_pallas.1} parent=5 // pred_region
      %s2423 = ssub.s32 %s17, 2
      // Predicated region
      $region73: #{unet_out_up_pallas.1} parent=71 // pred_check
        %p2424 = pneg %p333
      $region74: #{unet_out_up_pallas.1} parent=71 // pred_check_branch
        %2426 = sbr.rel (%p2424) target = $region76
      $region75: #{unet_out_up_pallas.1} parent=71 // pred_region
        %s2427 = smul.u32 2, %s29
        %p2428 = scmp.lt.s32.totalorder %s28, 1
        %s2429 = scalar_select %p2428, %s28, 1
        %p2430 = scmp.lt.s32.totalorder %s2427, 7
        %s2431 = scalar_select %p2430, %s2427, 7
        %s2432 = smul.addr %s2429, 8
        %s2433 = sadd.s32 %s2431, %s2432
        %s2434 = smul.addr %s2433, 4
        %s2435 = scalar_lea.vmem %s11, %s2434
      $region76: #{unet_out_up_pallas.1} parent=71 // pred_fallthru
        _
    $region72: #{unet_out_up_pallas.1} parent=5 // pred_fallthru
      _
  $region6: #{unet_out_up_pallas.1} parent=0 // loop_footer
    %s21 = sadd.s32 1, %s17
  $region7: #{unet_out_up_pallas.1} parent=0 // loop_footer_branch
    %16 = sbr.rel target = $region3
  $region8: #{unet_out_up_pallas.1} parent=0 // loop_exit
    _

</llo_original>
